<compile_context>
chip_gen: v6e
topology: v6e:2x2x1
jax: 0.10.0
libtpu: 0.0.40
codegen_flags: <defaults>
</compile_context>

<pallas_src>
import math
import functools

import jax
import jax.numpy as jnp
from jax.experimental import pallas as pl
from jax.experimental.pallas import tpu as pltpu  # noqa: F401  (TPU backend)

# ----------------------- config -----------------------
VOCAB = 128
HIDDEN = 32
N_HEADS = 2
HEAD_DIM = HIDDEN // N_HEADS          # 16
INTERMEDIATE = 64
N_LAYERS = 2
MAX_POS = 16
TYPE_VOCAB = 2
LN_EPS = 1e-12
SQRT2 = math.sqrt(2.0)
NEG_INF = -1e30
LANE = 128                            # lane width of both packed parameter slabs

# ---- packed bf16 weight slab: row offsets (all 8-aligned) ----
W_QKV = 0                             # (HIDDEN, 128)  fused q|k|v, 96 valid lanes
W_WO = HIDDEN                         # (HIDDEN, 32)   output projection
W_WI = 2 * HIDDEN                     # (HIDDEN, 64)   FFN in
W_WF = 3 * HIDDEN                     # (INTERMEDIATE, 32) FFN out
W_LAYER = 3 * HIDDEN + INTERMEDIATE   # 160 rows per layer
W_MLM = N_LAYERS * W_LAYER            # 320: MLM transform (HIDDEN, 32)
W_DEC = W_MLM + HIDDEN                # 352: tied decoder (HIDDEN, 128)
W_ROWS = W_DEC + HIDDEN               # 384

# ---- packed f32 bias / LayerNorm slab: row indices ----
P_EG, P_EB = 0, 1                     # embedding LayerNorm gamma / beta
P_LAYER0 = 2
P_LAYER = 8                           # rows per layer
(P_QKVB, P_BO, P_LN1G, P_LN1B, P_BI, P_BF, P_LN2G, P_LN2B) = range(8)
P_MLMB = P_LAYER0 + N_LAYERS * P_LAYER            # 18
P_MLNG, P_MLNB, P_DECB = P_MLMB + 1, P_MLMB + 2, P_MLMB + 3
P_ROWS = P_DECB + 1                   # 22


# ----------------------- fused kernel -----------------------
def _bert_fused_kernel(
    x_ref,        # (N, H)        summed embeddings
    p_ref,        # (P_ROWS, 128) f32 slab: every bias / LayerNorm vector
    w_ref,        # (W_ROWS, 128) bf16 slab: every matmul weight
    onehot_ref,   # (N, V)        f32 one-hot labels (all-zero row == ignored)
    logits_ref,   # out (N, V)
    loss_ref,     # out (1, 1)
    *, batch, seq):

    n_tok = batch * seq

    def mm(a, b):
        # bf16 MXU operands, f32 accumulation; elementwise math stays f32.
        return jnp.dot(a.astype(jnp.bfloat16), b.astype(jnp.bfloat16),
                       preferred_element_type=jnp.float32)

    def mm_nt(a, b):
        # a @ b.T without materializing the transposed operand.
        return jax.lax.dot_general(
            a.astype(jnp.bfloat16), b.astype(jnp.bfloat16),
            dimension_numbers=(((1,), (1,)), ((), ())),
            preferred_element_type=jnp.float32)

    def ln(h, g, b):
        mu = jnp.mean(h, axis=-1, keepdims=True)
        var = jnp.mean(jnp.square(h - mu), axis=-1, keepdims=True)
        return (h - mu) * jax.lax.rsqrt(var + LN_EPS) * g + b

    def gelu(y):
        # exact erf GELU (matches HF BERT "gelu" activation)
        return 0.5 * y * (1.0 + jax.lax.erf(y / SQRT2))

    def prow(r, width=LANE):
        # one (1, width) bias / LayerNorm row from the packed f32 slab
        return p_ref[r:r + 1, 0:width]

    # Block-diagonal "same sequence" additive bias (exact integer segment ids).
    ri = jax.lax.broadcasted_iota(jnp.int32, (n_tok, n_tok), 0)
    ci = jax.lax.broadcasted_iota(jnp.int32, (n_tok, n_tok), 1)
    if (seq & (seq - 1)) == 0:
        sh = seq.bit_length() - 1
        same = (ri >> sh) == (ci >> sh)
    else:
        same = (ri // seq) == (ci // seq)      # exact; no float floor
    attn_bias = jnp.where(same, 0.0, NEG_INF)

    x = ln(x_ref[...], prow(P_EG, HIDDEN), prow(P_EB, HIDDEN))

    for l in range(N_LAYERS):                                  # static unroll (2)
        wb = l * W_LAYER
        pb = P_LAYER0 + l * P_LAYER

        # One fused 128-lane Q|K|V projection: [q0|q1|k0|k1|v0|v1], 16 lanes each,
        # padded lanes are zero; 1/sqrt(head_dim) already folded into Q at init.
        qkv = mm(x, w_ref[wb + W_QKV: wb + W_QKV + HIDDEN, :]) + prow(pb + P_QKVB)

        ctxs = []
        for h in range(N_HEADS):                               # static unroll (2)
            q_h = qkv[:, h * HEAD_DIM:(h + 1) * HEAD_DIM]
            k_h = qkv[:, (N_HEADS + h) * HEAD_DIM:(N_HEADS + h + 1) * HEAD_DIM]
            v_h = qkv[:, (2 * N_HEADS + h) * HEAD_DIM:(2 * N_HEADS + h + 1) * HEAD_DIM]
            s = mm_nt(q_h, k_h) + attn_bias                    # (N, N)
            s = s - jnp.max(s, axis=-1, keepdims=True)
            p = jnp.exp(s)
            p = p * pl.reciprocal(jnp.sum(p, axis=-1, keepdims=True), approx=True)
            ctxs.append(mm(p, v_h))                            # (N, HEAD_DIM)
        ctx = jnp.concatenate(ctxs, axis=-1)                   # (N, H)

        # Single fused output projection over both heads.
        wo = w_ref[wb + W_WO: wb + W_WO + HIDDEN, 0:HIDDEN]
        attn = mm(ctx, wo) + prow(pb + P_BO, HIDDEN)
        x = ln(x + attn, prow(pb + P_LN1G, HIDDEN), prow(pb + P_LN1B, HIDDEN))

        wi = w_ref[wb + W_WI: wb + W_WI + HIDDEN, 0:INTERMEDIATE]
        f = gelu(mm(x, wi) + prow(pb + P_BI, INTERMEDIATE))
        wf = w_ref[wb + W_WF: wb + W_WF + INTERMEDIATE, 0:HIDDEN]
        f = mm(f, wf) + prow(pb + P_BF, HIDDEN)
        x = ln(x + f, prow(pb + P_LN2G, HIDDEN), prow(pb + P_LN2B, HIDDEN))

    # MLM head: dense + exact GELU -> LN -> tied decoder (+ bias).
    t = gelu(mm(x, w_ref[W_MLM:W_MLM + HIDDEN, 0:HIDDEN]) + prow(P_MLMB, HIDDEN))
    t = ln(t, prow(P_MLNG, HIDDEN), prow(P_MLNB, HIDDEN))
    logits = mm(t, w_ref[W_DEC:W_DEC + HIDDEN, :]) + prow(P_DECB)   # (N, V) lane-dense
    logits_ref[...] = logits

    # Fused masked-LM cross entropy (logits never round-trip through HBM).
    onehot = onehot_ref[...]
    m = jnp.max(logits, axis=-1, keepdims=True)
    lse = jnp.log(jnp.sum(jnp.exp(logits - m), axis=-1, keepdims=True)) + m
    lbl = jnp.sum(onehot * logits, axis=-1, keepdims=True)
    valid = jnp.sum(onehot, axis=-1, keepdims=True)
    total = jnp.sum((lse - lbl) * valid)
    denom = jnp.sum(valid)
    # No clamp: all-ignored labels -> 0/0 = NaN, matching torch CE(ignore_index=-100).
    loss_ref[...] = jnp.reshape(total / denom, (1, 1))


# ----------------------- parameters -----------------------
def _pad_lanes(w):
    w = jnp.asarray(w, jnp.float32)
    return jnp.pad(w, ((0, 0), (0, LANE - w.shape[-1])))


def _row(v):
    v = jnp.asarray(v, jnp.float32).reshape(1, -1)
    return jnp.pad(v, ((0, 0), (0, LANE - v.shape[1])))


def init_params(key):
    keys = iter(jax.random.split(key, 32))

    def nrm(shape, scale=0.02):
        return (scale * jax.random.normal(next(keys), shape)).astype(jnp.float32)

    zeros = lambda s: jnp.zeros(s, jnp.float32)
    ones = lambda s: jnp.ones(s, jnp.float32)

    word_emb = nrm((VOCAB, HIDDEN))
    att_scale = 1.0 / math.sqrt(HEAD_DIM)

    w_blocks, p_rows = [], []
    p_rows += [_row(ones((1, HIDDEN))), _row(zeros((1, HIDDEN)))]      # emb LN g, b

    for _ in range(N_LAYERS):
        Wq = nrm((HIDDEN, HIDDEN)); Wk = nrm((HIDDEN, HIDDEN))
        Wv = nrm((HIDDEN, HIDDEN)); Wo = nrm((HIDDEN, HIDDEN))
        bq = zeros((1, HIDDEN)); bk = zeros((1, HIDDEN)); bv = zeros((1, HIDDEN))
        # Narrow fused QKV: [q_h0|q_h1|k_h0|k_h1|v_h0|v_h1] = 96 valid lanes,
        # zero-padded to 128; attention scale folded into the Q columns (exact).
        qkv_w = jnp.concatenate([Wq * att_scale, Wk, Wv], axis=1)      # (H, 96)
        qkv_b = jnp.concatenate([bq * att_scale, bk, bv], axis=1)      # (1, 96)
        Wi = nrm((HIDDEN, INTERMEDIATE)); Wf = nrm((INTERMEDIATE, HIDDEN))

        w_blocks += [_pad_lanes(qkv_w), _pad_lanes(Wo), _pad_lanes(Wi), _pad_lanes(Wf)]
        p_rows += [_row(qkv_b), _row(zeros((1, HIDDEN))),              # qkv_b, bo
                   _row(ones((1, HIDDEN))), _row(zeros((1, HIDDEN))),  # ln1 g, b
                   _row(zeros((1, INTERMEDIATE))), _row(zeros((1, HIDDEN))),  # bi, bf
                   _row(ones((1, HIDDEN))), _row(zeros((1, HIDDEN)))]  # ln2 g, b

    mlm_w = nrm((HIDDEN, HIDDEN))
    # Tied decoder weight = word_emb.T, transposed ONCE here (never per forward).
    w_blocks += [_pad_lanes(mlm_w), _pad_lanes(word_emb.T)]
    p_rows += [_row(zeros((1, HIDDEN))),                               # mlm_b
               _row(ones((1, HIDDEN))), _row(zeros((1, HIDDEN))),      # mlm LN g, b
               _row(zeros((1, VOCAB)))]                                # dec_b

    w_slab = jnp.concatenate(w_blocks, axis=0).astype(jnp.bfloat16)    # (384, 128)
    p_slab = jnp.concatenate(p_rows, axis=0)                           # (22, 128)
    assert w_slab.shape == (W_ROWS, LANE) and p_slab.shape == (P_ROWS, LANE)

    return {
        "word_emb": word_emb,                 # f32, used for the embedding gather
        "pos_emb": nrm((MAX_POS, HIDDEN)),
        "type_emb": nrm((TYPE_VOCAB, HIDDEN)),
        "w_slab": w_slab,                     # single bf16 weight slab
        "p_slab": p_slab,                     # single f32 bias/LN slab
    }


# ----------------------- forward (BertPred.forward) -----------------------
def bert_pred_forward(params, input_ids, labels=None):
    B, S = input_ids.shape
    N = B * S

    # Embedding gathers (word/pos/type) stay as plain-JAX glue feeding the kernel.
    emb = (params["word_emb"][input_ids]
           + params["pos_emb"][:S][None, :, :]
           + params["type_emb"][0][None, None, :])
    x = emb.reshape(N, HIDDEN).astype(jnp.float32)

    # Labels as a lane-dense (N, V) one-hot; ignore_index=-100 rows are all-zero.
    if labels is None:
        onehot = jnp.zeros((N, VOCAB), jnp.float32)
    else:
        lab = labels.reshape(N, 1).astype(jnp.int32)
        onehot = ((lab == jnp.arange(VOCAB, dtype=jnp.int32)[None, :])
                  & (lab != -100)).astype(jnp.float32)

    kern = functools.partial(_bert_fused_kernel, batch=B, seq=S)
    logits_flat, loss = pl.pallas_call(
        kern,
        out_shape=(jax.ShapeDtypeStruct((N, VOCAB), jnp.float32),
                   jax.ShapeDtypeStruct((1, 1), jnp.float32)),
    )(x, params["p_slab"], params["w_slab"], onehot)

    logits = logits_flat.reshape(B, S, VOCAB)
    if labels is None:
        return logits
    return loss[0, 0], logits


# ----------------------- main -----------------------
if __name__ == "__main__":
    key = jax.random.PRNGKey(0)
    pkey, ikey, lkey, mkey = jax.random.split(key, 4)

    params = init_params(pkey)

    B, S = 2, 8
    input_ids = jax.random.randint(ikey, (B, S), 0, VOCAB, dtype=jnp.int32)
    raw_labels = jax.random.randint(lkey, (B, S), 0, VOCAB, dtype=jnp.int32)
    mask = jax.random.bernoulli(mkey, 0.5, (B, S))
    labels = jnp.where(mask, raw_labels, -100)   # MLM-style ignore_index=-100

    loss, logits = jax.jit(bert_pred_forward)(params, input_ids, labels)
    jax.block_until_ready((loss, logits))

    assert logits.shape == (B, S, VOCAB)
    assert loss.shape == ()
    print("KERNEL_OK")
</pallas_src>

<mosaic_0001>
module attributes {stable_mosaic.version = 11 : i64} {
  func.func @_bert_fused_kernel(%arg0: memref<16x32xf32, #tpu.memory_space<vmem>>, %arg1: memref<22x128xf32, #tpu.memory_space<vmem>>, %arg2: memref<384x128xbf16, #tpu.memory_space<vmem>>, %arg3: memref<16x128xf32, #tpu.memory_space<vmem>>, %arg4: memref<16x128xf32, #tpu.memory_space<vmem>>, %arg5: memref<1x1xf32, #tpu.memory_space<vmem>>) attributes {dimension_semantics = [], scalar_prefetch = 0 : i64, scratch_operands = 0 : i64, tpu.core_type = #tpu.core_type<tc>} {
    %0 = tpu.iota {dimensions = array<i32: 0>} : vector<16x16xi32>
    %1 = tpu.iota {dimensions = array<i32: 1>} : vector<16x16xi32>
    %c3_i32 = arith.constant 3 : i32
    %2 = vector.broadcast %c3_i32 : i32 to vector<16x16xi32>
    %3 = arith.shrsi %0, %2 : vector<16x16xi32>
    %c3_i32_0 = arith.constant 3 : i32
    %4 = vector.broadcast %c3_i32_0 : i32 to vector<16x16xi32>
    %5 = arith.shrsi %1, %4 : vector<16x16xi32>
    %6 = arith.cmpi eq, %3, %5 : vector<16x16xi32>
    %cst = arith.constant 0.000000e+00 : f32
    %cst_1 = arith.constant -1.000000e+30 : f32
    %7 = vector.broadcast %cst : f32 to vector<16x16xf32>
    %8 = vector.broadcast %cst_1 : f32 to vector<16x16xf32>
    %9 = arith.select %6, %7, %8 : vector<16x16xi1>, vector<16x16xf32>
    %c0 = arith.constant 0 : index
    %c0_2 = arith.constant 0 : index
    %10 = vector.load %arg0[%c0, %c0_2] : memref<16x32xf32, #tpu.memory_space<vmem>>, vector<16x32xf32>
    %c0_3 = arith.constant 0 : index
    %c0_4 = arith.constant 0 : index
    %11 = vector.load %arg1[%c0_3, %c0_4] : memref<22x128xf32, #tpu.memory_space<vmem>>, vector<1x32xf32>
    %c1 = arith.constant 1 : index
    %c0_5 = arith.constant 0 : index
    %12 = vector.load %arg1[%c1, %c0_5] : memref<22x128xf32, #tpu.memory_space<vmem>>, vector<1x32xf32>
    %cst_6 = arith.constant dense<0.000000e+00> : vector<16xf32>
    %13 = vector.multi_reduction <add>, %10, %cst_6 [1] : vector<16x32xf32> to vector<16xf32>
    %14 = vector.shape_cast %13 : vector<16xf32> to vector<16x1xf32>
    %cst_7 = arith.constant 3.200000e+01 : f32
    %15 = vector.broadcast %cst_7 : f32 to vector<16x1xf32>
    %16 = arith.divf %14, %15 : vector<16x1xf32>
    %17 = vector.broadcast %16 : vector<16x1xf32> to vector<16x32xf32>
    %18 = arith.subf %10, %17 : vector<16x32xf32>
    %19 = arith.mulf %18, %18 : vector<16x32xf32>
    %cst_8 = arith.constant dense<0.000000e+00> : vector<16xf32>
    %20 = vector.multi_reduction <add>, %19, %cst_8 [1] : vector<16x32xf32> to vector<16xf32>
    %21 = vector.shape_cast %20 : vector<16xf32> to vector<16x1xf32>
    %cst_9 = arith.constant 3.200000e+01 : f32
    %22 = vector.broadcast %cst_9 : f32 to vector<16x1xf32>
    %23 = arith.divf %21, %22 : vector<16x1xf32>
    %24 = vector.broadcast %16 : vector<16x1xf32> to vector<16x32xf32>
    %25 = arith.subf %10, %24 : vector<16x32xf32>
    %cst_10 = arith.constant 9.99999996E-13 : f32
    %26 = vector.broadcast %cst_10 : f32 to vector<16x1xf32>
    %27 = arith.addf %23, %26 : vector<16x1xf32>
    %28 = math.rsqrt %27 : vector<16x1xf32>
    %29 = vector.broadcast %28 : vector<16x1xf32> to vector<16x32xf32>
    %30 = arith.mulf %25, %29 : vector<16x32xf32>
    %31 = vector.broadcast %11 : vector<1x32xf32> to vector<16x32xf32>
    %32 = arith.mulf %30, %31 : vector<16x32xf32>
    %33 = vector.broadcast %12 : vector<1x32xf32> to vector<16x32xf32>
    %34 = arith.addf %32, %33 : vector<16x32xf32>
    %c0_11 = arith.constant 0 : index
    %c0_12 = arith.constant 0 : index
    %35 = vector.load %arg2[%c0_11, %c0_12] : memref<384x128xbf16, #tpu.memory_space<vmem>>, vector<32x128xbf16>
    %36 = arith.truncf %34 : vector<16x32xf32> to vector<16x32xbf16>
    %cst_13 = arith.constant dense<0.000000e+00> : vector<16x128xf32>
    %37 = tpu.matmul %36, %35, %cst_13 {dimension_numbers = #tpu.dot_dimension_numbers<[1], [0], [0], [1], [0, 0, 1, 1], [], []>} : vector<16x32xbf16>, vector<32x128xbf16>, vector<16x128xf32> -> vector<16x128xf32>
    %c2 = arith.constant 2 : index
    %c0_14 = arith.constant 0 : index
    %38 = vector.load %arg1[%c2, %c0_14] : memref<22x128xf32, #tpu.memory_space<vmem>>, vector<1x128xf32>
    %39 = vector.broadcast %38 : vector<1x128xf32> to vector<16x128xf32>
    %40 = arith.addf %37, %39 : vector<16x128xf32>
    %41 = vector.extract_strided_slice %40 {offsets = [0, 0], sizes = [16, 16], strides = [1, 1]} : vector<16x128xf32> to vector<16x16xf32>
    %42 = vector.extract_strided_slice %40 {offsets = [0, 32], sizes = [16, 16], strides = [1, 1]} : vector<16x128xf32> to vector<16x16xf32>
    %43 = vector.extract_strided_slice %40 {offsets = [0, 64], sizes = [16, 16], strides = [1, 1]} : vector<16x128xf32> to vector<16x16xf32>
    %44 = arith.truncf %41 : vector<16x16xf32> to vector<16x16xbf16>
    %45 = arith.truncf %42 : vector<16x16xf32> to vector<16x16xbf16>
    %cst_15 = arith.constant dense<0.000000e+00> : vector<16x16xf32>
    %46 = tpu.matmul %44, %45, %cst_15 {dimension_numbers = #tpu.dot_dimension_numbers<[1], [1], [0], [0], [0, 0, 1, 0], [], []>} : vector<16x16xbf16>, vector<16x16xbf16>, vector<16x16xf32> -> vector<16x16xf32>
    %47 = arith.addf %46, %9 : vector<16x16xf32>
    %cst_16 = arith.constant dense<0xFF800000> : vector<16xf32>
    %48 = vector.multi_reduction <maximumf>, %47, %cst_16 [1] : vector<16x16xf32> to vector<16xf32>
    %49 = vector.shape_cast %48 : vector<16xf32> to vector<16x1xf32>
    %50 = vector.broadcast %49 : vector<16x1xf32> to vector<16x16xf32>
    %51 = arith.subf %47, %50 : vector<16x16xf32>
    %52 = math.exp %51 : vector<16x16xf32>
    %cst_17 = arith.constant dense<0.000000e+00> : vector<16xf32>
    %53 = vector.multi_reduction <add>, %52, %cst_17 [1] : vector<16x16xf32> to vector<16xf32>
    %54 = vector.shape_cast %53 : vector<16xf32> to vector<16x1xf32>
    %55 = tpu.reciprocal %54 {approx = true} : vector<16x1xf32> -> vector<16x1xf32>
    %56 = vector.broadcast %55 : vector<16x1xf32> to vector<16x16xf32>
    %57 = arith.mulf %52, %56 : vector<16x16xf32>
    %58 = arith.truncf %57 : vector<16x16xf32> to vector<16x16xbf16>
    %59 = arith.truncf %43 : vector<16x16xf32> to vector<16x16xbf16>
    %cst_18 = arith.constant dense<0.000000e+00> : vector<16x16xf32>
    %60 = tpu.matmul %58, %59, %cst_18 {dimension_numbers = #tpu.dot_dimension_numbers<[1], [0], [0], [1], [0, 0, 1, 1], [], []>} : vector<16x16xbf16>, vector<16x16xbf16>, vector<16x16xf32> -> vector<16x16xf32>
    %61 = vector.extract_strided_slice %40 {offsets = [0, 16], sizes = [16, 16], strides = [1, 1]} : vector<16x128xf32> to vector<16x16xf32>
    %62 = vector.extract_strided_slice %40 {offsets = [0, 48], sizes = [16, 16], strides = [1, 1]} : vector<16x128xf32> to vector<16x16xf32>
    %63 = vector.extract_strided_slice %40 {offsets = [0, 80], sizes = [16, 16], strides = [1, 1]} : vector<16x128xf32> to vector<16x16xf32>
    %64 = arith.truncf %61 : vector<16x16xf32> to vector<16x16xbf16>
    %65 = arith.truncf %62 : vector<16x16xf32> to vector<16x16xbf16>
    %cst_19 = arith.constant dense<0.000000e+00> : vector<16x16xf32>
    %66 = tpu.matmul %64, %65, %cst_19 {dimension_numbers = #tpu.dot_dimension_numbers<[1], [1], [0], [0], [0, 0, 1, 0], [], []>} : vector<16x16xbf16>, vector<16x16xbf16>, vector<16x16xf32> -> vector<16x16xf32>
    %67 = arith.addf %66, %9 : vector<16x16xf32>
    %cst_20 = arith.constant dense<0xFF800000> : vector<16xf32>
    %68 = vector.multi_reduction <maximumf>, %67, %cst_20 [1] : vector<16x16xf32> to vector<16xf32>
    %69 = vector.shape_cast %68 : vector<16xf32> to vector<16x1xf32>
    %70 = vector.broadcast %69 : vector<16x1xf32> to vector<16x16xf32>
    %71 = arith.subf %67, %70 : vector<16x16xf32>
    %72 = math.exp %71 : vector<16x16xf32>
    %cst_21 = arith.constant dense<0.000000e+00> : vector<16xf32>
    %73 = vector.multi_reduction <add>, %72, %cst_21 [1] : vector<16x16xf32> to vector<16xf32>
    %74 = vector.shape_cast %73 : vector<16xf32> to vector<16x1xf32>
    %75 = tpu.reciprocal %74 {approx = true} : vector<16x1xf32> -> vector<16x1xf32>
    %76 = vector.broadcast %75 : vector<16x1xf32> to vector<16x16xf32>
    %77 = arith.mulf %72, %76 : vector<16x16xf32>
    %78 = arith.truncf %77 : vector<16x16xf32> to vector<16x16xbf16>
    %79 = arith.truncf %63 : vector<16x16xf32> to vector<16x16xbf16>
    %cst_22 = arith.constant dense<0.000000e+00> : vector<16x16xf32>
    %80 = tpu.matmul %78, %79, %cst_22 {dimension_numbers = #tpu.dot_dimension_numbers<[1], [0], [0], [1], [0, 0, 1, 1], [], []>} : vector<16x16xbf16>, vector<16x16xbf16>, vector<16x16xf32> -> vector<16x16xf32>
    %81 = tpu.concatenate %60, %80 in 1 : vector<16x16xf32>, vector<16x16xf32> -> vector<16x32xf32>
    %c32 = arith.constant 32 : index
    %c0_23 = arith.constant 0 : index
    %82 = vector.load %arg2[%c32, %c0_23] : memref<384x128xbf16, #tpu.memory_space<vmem>>, vector<32x32xbf16>
    %83 = arith.truncf %81 : vector<16x32xf32> to vector<16x32xbf16>
    %cst_24 = arith.constant dense<0.000000e+00> : vector<16x32xf32>
    %84 = tpu.matmul %83, %82, %cst_24 {dimension_numbers = #tpu.dot_dimension_numbers<[1], [0], [0], [1], [0, 0, 1, 1], [], []>} : vector<16x32xbf16>, vector<32x32xbf16>, vector<16x32xf32> -> vector<16x32xf32>
    %c3 = arith.constant 3 : index
    %c0_25 = arith.constant 0 : index
    %85 = vector.load %arg1[%c3, %c0_25] : memref<22x128xf32, #tpu.memory_space<vmem>>, vector<1x32xf32>
    %86 = vector.broadcast %85 : vector<1x32xf32> to vector<16x32xf32>
    %87 = arith.addf %84, %86 : vector<16x32xf32>
    %88 = arith.addf %34, %87 : vector<16x32xf32>
    %c4 = arith.constant 4 : index
    %c0_26 = arith.constant 0 : index
    %89 = vector.load %arg1[%c4, %c0_26] : memref<22x128xf32, #tpu.memory_space<vmem>>, vector<1x32xf32>
    %c5 = arith.constant 5 : index
    %c0_27 = arith.constant 0 : index
    %90 = vector.load %arg1[%c5, %c0_27] : memref<22x128xf32, #tpu.memory_space<vmem>>, vector<1x32xf32>
    %cst_28 = arith.constant dense<0.000000e+00> : vector<16xf32>
    %91 = vector.multi_reduction <add>, %88, %cst_28 [1] : vector<16x32xf32> to vector<16xf32>
    %92 = vector.shape_cast %91 : vector<16xf32> to vector<16x1xf32>
    %cst_29 = arith.constant 3.200000e+01 : f32
    %93 = vector.broadcast %cst_29 : f32 to vector<16x1xf32>
    %94 = arith.divf %92, %93 : vector<16x1xf32>
    %95 = vector.broadcast %94 : vector<16x1xf32> to vector<16x32xf32>
    %96 = arith.subf %88, %95 : vector<16x32xf32>
    %97 = arith.mulf %96, %96 : vector<16x32xf32>
    %cst_30 = arith.constant dense<0.000000e+00> : vector<16xf32>
    %98 = vector.multi_reduction <add>, %97, %cst_30 [1] : vector<16x32xf32> to vector<16xf32>
    %99 = vector.shape_cast %98 : vector<16xf32> to vector<16x1xf32>
    %cst_31 = arith.constant 3.200000e+01 : f32
    %100 = vector.broadcast %cst_31 : f32 to vector<16x1xf32>
    %101 = arith.divf %99, %100 : vector<16x1xf32>
    %102 = vector.broadcast %94 : vector<16x1xf32> to vector<16x32xf32>
    %103 = arith.subf %88, %102 : vector<16x32xf32>
    %cst_32 = arith.constant 9.99999996E-13 : f32
    %104 = vector.broadcast %cst_32 : f32 to vector<16x1xf32>
    %105 = arith.addf %101, %104 : vector<16x1xf32>
    %106 = math.rsqrt %105 : vector<16x1xf32>
    %107 = vector.broadcast %106 : vector<16x1xf32> to vector<16x32xf32>
    %108 = arith.mulf %103, %107 : vector<16x32xf32>
    %109 = vector.broadcast %89 : vector<1x32xf32> to vector<16x32xf32>
    %110 = arith.mulf %108, %109 : vector<16x32xf32>
    %111 = vector.broadcast %90 : vector<1x32xf32> to vector<16x32xf32>
    %112 = arith.addf %110, %111 : vector<16x32xf32>
    %c64 = arith.constant 64 : index
    %c0_33 = arith.constant 0 : index
    %113 = vector.load %arg2[%c64, %c0_33] : memref<384x128xbf16, #tpu.memory_space<vmem>>, vector<32x64xbf16>
    %114 = arith.truncf %112 : vector<16x32xf32> to vector<16x32xbf16>
    %cst_34 = arith.constant dense<0.000000e+00> : vector<16x64xf32>
    %115 = tpu.matmul %114, %113, %cst_34 {dimension_numbers = #tpu.dot_dimension_numbers<[1], [0], [0], [1], [0, 0, 1, 1], [], []>} : vector<16x32xbf16>, vector<32x64xbf16>, vector<16x64xf32> -> vector<16x64xf32>
    %c6 = arith.constant 6 : index
    %c0_35 = arith.constant 0 : index
    %116 = vector.load %arg1[%c6, %c0_35] : memref<22x128xf32, #tpu.memory_space<vmem>>, vector<1x64xf32>
    %117 = vector.broadcast %116 : vector<1x64xf32> to vector<16x64xf32>
    %118 = arith.addf %115, %117 : vector<16x64xf32>
    %cst_36 = arith.constant 5.000000e-01 : f32
    %119 = vector.broadcast %cst_36 : f32 to vector<16x64xf32>
    %120 = arith.mulf %119, %118 : vector<16x64xf32>
    %cst_37 = arith.constant 1.41421354 : f32
    %121 = vector.broadcast %cst_37 : f32 to vector<16x64xf32>
    %122 = arith.divf %118, %121 : vector<16x64xf32>
    %123 = math.erf %122 : vector<16x64xf32>
    %cst_38 = arith.constant 1.000000e+00 : f32
    %124 = vector.broadcast %cst_38 : f32 to vector<16x64xf32>
    %125 = arith.addf %124, %123 : vector<16x64xf32>
    %126 = arith.mulf %120, %125 : vector<16x64xf32>
    %c96 = arith.constant 96 : index
    %c0_39 = arith.constant 0 : index
    %127 = vector.load %arg2[%c96, %c0_39] : memref<384x128xbf16, #tpu.memory_space<vmem>>, vector<64x32xbf16>
    %128 = arith.truncf %126 : vector<16x64xf32> to vector<16x64xbf16>
    %cst_40 = arith.constant dense<0.000000e+00> : vector<16x32xf32>
    %129 = tpu.matmul %128, %127, %cst_40 {dimension_numbers = #tpu.dot_dimension_numbers<[1], [0], [0], [1], [0, 0, 1, 1], [], []>} : vector<16x64xbf16>, vector<64x32xbf16>, vector<16x32xf32> -> vector<16x32xf32>
    %c7 = arith.constant 7 : index
    %c0_41 = arith.constant 0 : index
    %130 = vector.load %arg1[%c7, %c0_41] : memref<22x128xf32, #tpu.memory_space<vmem>>, vector<1x32xf32>
    %131 = vector.broadcast %130 : vector<1x32xf32> to vector<16x32xf32>
    %132 = arith.addf %129, %131 : vector<16x32xf32>
    %133 = arith.addf %112, %132 : vector<16x32xf32>
    %c8 = arith.constant 8 : index
    %c0_42 = arith.constant 0 : index
    %134 = vector.load %arg1[%c8, %c0_42] : memref<22x128xf32, #tpu.memory_space<vmem>>, vector<1x32xf32>
    %c9 = arith.constant 9 : index
    %c0_43 = arith.constant 0 : index
    %135 = vector.load %arg1[%c9, %c0_43] : memref<22x128xf32, #tpu.memory_space<vmem>>, vector<1x32xf32>
    %cst_44 = arith.constant dense<0.000000e+00> : vector<16xf32>
    %136 = vector.multi_reduction <add>, %133, %cst_44 [1] : vector<16x32xf32> to vector<16xf32>
    %137 = vector.shape_cast %136 : vector<16xf32> to vector<16x1xf32>
    %cst_45 = arith.constant 3.200000e+01 : f32
    %138 = vector.broadcast %cst_45 : f32 to vector<16x1xf32>
    %139 = arith.divf %137, %138 : vector<16x1xf32>
    %140 = vector.broadcast %139 : vector<16x1xf32> to vector<16x32xf32>
    %141 = arith.subf %133, %140 : vector<16x32xf32>
    %142 = arith.mulf %141, %141 : vector<16x32xf32>
    %cst_46 = arith.constant dense<0.000000e+00> : vector<16xf32>
    %143 = vector.multi_reduction <add>, %142, %cst_46 [1] : vector<16x32xf32> to vector<16xf32>
    %144 = vector.shape_cast %143 : vector<16xf32> to vector<16x1xf32>
    %cst_47 = arith.constant 3.200000e+01 : f32
    %145 = vector.broadcast %cst_47 : f32 to vector<16x1xf32>
    %146 = arith.divf %144, %145 : vector<16x1xf32>
    %147 = vector.broadcast %139 : vector<16x1xf32> to vector<16x32xf32>
    %148 = arith.subf %133, %147 : vector<16x32xf32>
    %cst_48 = arith.constant 9.99999996E-13 : f32
    %149 = vector.broadcast %cst_48 : f32 to vector<16x1xf32>
    %150 = arith.addf %146, %149 : vector<16x1xf32>
    %151 = math.rsqrt %150 : vector<16x1xf32>
    %152 = vector.broadcast %151 : vector<16x1xf32> to vector<16x32xf32>
    %153 = arith.mulf %148, %152 : vector<16x32xf32>
    %154 = vector.broadcast %134 : vector<1x32xf32> to vector<16x32xf32>
    %155 = arith.mulf %153, %154 : vector<16x32xf32>
    %156 = vector.broadcast %135 : vector<1x32xf32> to vector<16x32xf32>
    %157 = arith.addf %155, %156 : vector<16x32xf32>
    %c160 = arith.constant 160 : index
    %c0_49 = arith.constant 0 : index
    %158 = vector.load %arg2[%c160, %c0_49] : memref<384x128xbf16, #tpu.memory_space<vmem>>, vector<32x128xbf16>
    %159 = arith.truncf %157 : vector<16x32xf32> to vector<16x32xbf16>
    %cst_50 = arith.constant dense<0.000000e+00> : vector<16x128xf32>
    %160 = tpu.matmul %159, %158, %cst_50 {dimension_numbers = #tpu.dot_dimension_numbers<[1], [0], [0], [1], [0, 0, 1, 1], [], []>} : vector<16x32xbf16>, vector<32x128xbf16>, vector<16x128xf32> -> vector<16x128xf32>
    %c10 = arith.constant 10 : index
    %c0_51 = arith.constant 0 : index
    %161 = vector.load %arg1[%c10, %c0_51] : memref<22x128xf32, #tpu.memory_space<vmem>>, vector<1x128xf32>
    %162 = vector.broadcast %161 : vector<1x128xf32> to vector<16x128xf32>
    %163 = arith.addf %160, %162 : vector<16x128xf32>
    %164 = vector.extract_strided_slice %163 {offsets = [0, 0], sizes = [16, 16], strides = [1, 1]} : vector<16x128xf32> to vector<16x16xf32>
    %165 = vector.extract_strided_slice %163 {offsets = [0, 32], sizes = [16, 16], strides = [1, 1]} : vector<16x128xf32> to vector<16x16xf32>
    %166 = vector.extract_strided_slice %163 {offsets = [0, 64], sizes = [16, 16], strides = [1, 1]} : vector<16x128xf32> to vector<16x16xf32>
    %167 = arith.truncf %164 : vector<16x16xf32> to vector<16x16xbf16>
    %168 = arith.truncf %165 : vector<16x16xf32> to vector<16x16xbf16>
    %cst_52 = arith.constant dense<0.000000e+00> : vector<16x16xf32>
    %169 = tpu.matmul %167, %168, %cst_52 {dimension_numbers = #tpu.dot_dimension_numbers<[1], [1], [0], [0], [0, 0, 1, 0], [], []>} : vector<16x16xbf16>, vector<16x16xbf16>, vector<16x16xf32> -> vector<16x16xf32>
    %170 = arith.addf %169, %9 : vector<16x16xf32>
    %cst_53 = arith.constant dense<0xFF800000> : vector<16xf32>
    %171 = vector.multi_reduction <maximumf>, %170, %cst_53 [1] : vector<16x16xf32> to vector<16xf32>
    %172 = vector.shape_cast %171 : vector<16xf32> to vector<16x1xf32>
    %173 = vector.broadcast %172 : vector<16x1xf32> to vector<16x16xf32>
    %174 = arith.subf %170, %173 : vector<16x16xf32>
    %175 = math.exp %174 : vector<16x16xf32>
    %cst_54 = arith.constant dense<0.000000e+00> : vector<16xf32>
    %176 = vector.multi_reduction <add>, %175, %cst_54 [1] : vector<16x16xf32> to vector<16xf32>
    %177 = vector.shape_cast %176 : vector<16xf32> to vector<16x1xf32>
    %178 = tpu.reciprocal %177 {approx = true} : vector<16x1xf32> -> vector<16x1xf32>
    %179 = vector.broadcast %178 : vector<16x1xf32> to vector<16x16xf32>
    %180 = arith.mulf %175, %179 : vector<16x16xf32>
    %181 = arith.truncf %180 : vector<16x16xf32> to vector<16x16xbf16>
    %182 = arith.truncf %166 : vector<16x16xf32> to vector<16x16xbf16>
    %cst_55 = arith.constant dense<0.000000e+00> : vector<16x16xf32>
    %183 = tpu.matmul %181, %182, %cst_55 {dimension_numbers = #tpu.dot_dimension_numbers<[1], [0], [0], [1], [0, 0, 1, 1], [], []>} : vector<16x16xbf16>, vector<16x16xbf16>, vector<16x16xf32> -> vector<16x16xf32>
    %184 = vector.extract_strided_slice %163 {offsets = [0, 16], sizes = [16, 16], strides = [1, 1]} : vector<16x128xf32> to vector<16x16xf32>
    %185 = vector.extract_strided_slice %163 {offsets = [0, 48], sizes = [16, 16], strides = [1, 1]} : vector<16x128xf32> to vector<16x16xf32>
    %186 = vector.extract_strided_slice %163 {offsets = [0, 80], sizes = [16, 16], strides = [1, 1]} : vector<16x128xf32> to vector<16x16xf32>
    %187 = arith.truncf %184 : vector<16x16xf32> to vector<16x16xbf16>
    %188 = arith.truncf %185 : vector<16x16xf32> to vector<16x16xbf16>
    %cst_56 = arith.constant dense<0.000000e+00> : vector<16x16xf32>
    %189 = tpu.matmul %187, %188, %cst_56 {dimension_numbers = #tpu.dot_dimension_numbers<[1], [1], [0], [0], [0, 0, 1, 0], [], []>} : vector<16x16xbf16>, vector<16x16xbf16>, vector<16x16xf32> -> vector<16x16xf32>
    %190 = arith.addf %189, %9 : vector<16x16xf32>
    %cst_57 = arith.constant dense<0xFF800000> : vector<16xf32>
    %191 = vector.multi_reduction <maximumf>, %190, %cst_57 [1] : vector<16x16xf32> to vector<16xf32>
    %192 = vector.shape_cast %191 : vector<16xf32> to vector<16x1xf32>
    %193 = vector.broadcast %192 : vector<16x1xf32> to vector<16x16xf32>
    %194 = arith.subf %190, %193 : vector<16x16xf32>
    %195 = math.exp %194 : vector<16x16xf32>
    %cst_58 = arith.constant dense<0.000000e+00> : vector<16xf32>
    %196 = vector.multi_reduction <add>, %195, %cst_58 [1] : vector<16x16xf32> to vector<16xf32>
    %197 = vector.shape_cast %196 : vector<16xf32> to vector<16x1xf32>
    %198 = tpu.reciprocal %197 {approx = true} : vector<16x1xf32> -> vector<16x1xf32>
    %199 = vector.broadcast %198 : vector<16x1xf32> to vector<16x16xf32>
    %200 = arith.mulf %195, %199 : vector<16x16xf32>
    %201 = arith.truncf %200 : vector<16x16xf32> to vector<16x16xbf16>
    %202 = arith.truncf %186 : vector<16x16xf32> to vector<16x16xbf16>
    %cst_59 = arith.constant dense<0.000000e+00> : vector<16x16xf32>
    %203 = tpu.matmul %201, %202, %cst_59 {dimension_numbers = #tpu.dot_dimension_numbers<[1], [0], [0], [1], [0, 0, 1, 1], [], []>} : vector<16x16xbf16>, vector<16x16xbf16>, vector<16x16xf32> -> vector<16x16xf32>
    %204 = tpu.concatenate %183, %203 in 1 : vector<16x16xf32>, vector<16x16xf32> -> vector<16x32xf32>
    %c192 = arith.constant 192 : index
    %c0_60 = arith.constant 0 : index
    %205 = vector.load %arg2[%c192, %c0_60] : memref<384x128xbf16, #tpu.memory_space<vmem>>, vector<32x32xbf16>
    %206 = arith.truncf %204 : vector<16x32xf32> to vector<16x32xbf16>
    %cst_61 = arith.constant dense<0.000000e+00> : vector<16x32xf32>
    %207 = tpu.matmul %206, %205, %cst_61 {dimension_numbers = #tpu.dot_dimension_numbers<[1], [0], [0], [1], [0, 0, 1, 1], [], []>} : vector<16x32xbf16>, vector<32x32xbf16>, vector<16x32xf32> -> vector<16x32xf32>
    %c11 = arith.constant 11 : index
    %c0_62 = arith.constant 0 : index
    %208 = vector.load %arg1[%c11, %c0_62] : memref<22x128xf32, #tpu.memory_space<vmem>>, vector<1x32xf32>
    %209 = vector.broadcast %208 : vector<1x32xf32> to vector<16x32xf32>
    %210 = arith.addf %207, %209 : vector<16x32xf32>
    %211 = arith.addf %157, %210 : vector<16x32xf32>
    %c12 = arith.constant 12 : index
    %c0_63 = arith.constant 0 : index
    %212 = vector.load %arg1[%c12, %c0_63] : memref<22x128xf32, #tpu.memory_space<vmem>>, vector<1x32xf32>
    %c13 = arith.constant 13 : index
    %c0_64 = arith.constant 0 : index
    %213 = vector.load %arg1[%c13, %c0_64] : memref<22x128xf32, #tpu.memory_space<vmem>>, vector<1x32xf32>
    %cst_65 = arith.constant dense<0.000000e+00> : vector<16xf32>
    %214 = vector.multi_reduction <add>, %211, %cst_65 [1] : vector<16x32xf32> to vector<16xf32>
    %215 = vector.shape_cast %214 : vector<16xf32> to vector<16x1xf32>
    %cst_66 = arith.constant 3.200000e+01 : f32
    %216 = vector.broadcast %cst_66 : f32 to vector<16x1xf32>
    %217 = arith.divf %215, %216 : vector<16x1xf32>
    %218 = vector.broadcast %217 : vector<16x1xf32> to vector<16x32xf32>
    %219 = arith.subf %211, %218 : vector<16x32xf32>
    %220 = arith.mulf %219, %219 : vector<16x32xf32>
    %cst_67 = arith.constant dense<0.000000e+00> : vector<16xf32>
    %221 = vector.multi_reduction <add>, %220, %cst_67 [1] : vector<16x32xf32> to vector<16xf32>
    %222 = vector.shape_cast %221 : vector<16xf32> to vector<16x1xf32>
    %cst_68 = arith.constant 3.200000e+01 : f32
    %223 = vector.broadcast %cst_68 : f32 to vector<16x1xf32>
    %224 = arith.divf %222, %223 : vector<16x1xf32>
    %225 = vector.broadcast %217 : vector<16x1xf32> to vector<16x32xf32>
    %226 = arith.subf %211, %225 : vector<16x32xf32>
    %cst_69 = arith.constant 9.99999996E-13 : f32
    %227 = vector.broadcast %cst_69 : f32 to vector<16x1xf32>
    %228 = arith.addf %224, %227 : vector<16x1xf32>
    %229 = math.rsqrt %228 : vector<16x1xf32>
    %230 = vector.broadcast %229 : vector<16x1xf32> to vector<16x32xf32>
    %231 = arith.mulf %226, %230 : vector<16x32xf32>
    %232 = vector.broadcast %212 : vector<1x32xf32> to vector<16x32xf32>
    %233 = arith.mulf %231, %232 : vector<16x32xf32>
    %234 = vector.broadcast %213 : vector<1x32xf32> to vector<16x32xf32>
    %235 = arith.addf %233, %234 : vector<16x32xf32>
    %c224 = arith.constant 224 : index
    %c0_70 = arith.constant 0 : index
    %236 = vector.load %arg2[%c224, %c0_70] : memref<384x128xbf16, #tpu.memory_space<vmem>>, vector<32x64xbf16>
    %237 = arith.truncf %235 : vector<16x32xf32> to vector<16x32xbf16>
    %cst_71 = arith.constant dense<0.000000e+00> : vector<16x64xf32>
    %238 = tpu.matmul %237, %236, %cst_71 {dimension_numbers = #tpu.dot_dimension_numbers<[1], [0], [0], [1], [0, 0, 1, 1], [], []>} : vector<16x32xbf16>, vector<32x64xbf16>, vector<16x64xf32> -> vector<16x64xf32>
    %c14 = arith.constant 14 : index
    %c0_72 = arith.constant 0 : index
    %239 = vector.load %arg1[%c14, %c0_72] : memref<22x128xf32, #tpu.memory_space<vmem>>, vector<1x64xf32>
    %240 = vector.broadcast %239 : vector<1x64xf32> to vector<16x64xf32>
    %241 = arith.addf %238, %240 : vector<16x64xf32>
    %cst_73 = arith.constant 5.000000e-01 : f32
    %242 = vector.broadcast %cst_73 : f32 to vector<16x64xf32>
    %243 = arith.mulf %242, %241 : vector<16x64xf32>
    %cst_74 = arith.constant 1.41421354 : f32
    %244 = vector.broadcast %cst_74 : f32 to vector<16x64xf32>
    %245 = arith.divf %241, %244 : vector<16x64xf32>
    %246 = math.erf %245 : vector<16x64xf32>
    %cst_75 = arith.constant 1.000000e+00 : f32
    %247 = vector.broadcast %cst_75 : f32 to vector<16x64xf32>
    %248 = arith.addf %247, %246 : vector<16x64xf32>
    %249 = arith.mulf %243, %248 : vector<16x64xf32>
    %c256 = arith.constant 256 : index
    %c0_76 = arith.constant 0 : index
    %250 = vector.load %arg2[%c256, %c0_76] : memref<384x128xbf16, #tpu.memory_space<vmem>>, vector<64x32xbf16>
    %251 = arith.truncf %249 : vector<16x64xf32> to vector<16x64xbf16>
    %cst_77 = arith.constant dense<0.000000e+00> : vector<16x32xf32>
    %252 = tpu.matmul %251, %250, %cst_77 {dimension_numbers = #tpu.dot_dimension_numbers<[1], [0], [0], [1], [0, 0, 1, 1], [], []>} : vector<16x64xbf16>, vector<64x32xbf16>, vector<16x32xf32> -> vector<16x32xf32>
    %c15 = arith.constant 15 : index
    %c0_78 = arith.constant 0 : index
    %253 = vector.load %arg1[%c15, %c0_78] : memref<22x128xf32, #tpu.memory_space<vmem>>, vector<1x32xf32>
    %254 = vector.broadcast %253 : vector<1x32xf32> to vector<16x32xf32>
    %255 = arith.addf %252, %254 : vector<16x32xf32>
    %256 = arith.addf %235, %255 : vector<16x32xf32>
    %c16 = arith.constant 16 : index
    %c0_79 = arith.constant 0 : index
    %257 = vector.load %arg1[%c16, %c0_79] : memref<22x128xf32, #tpu.memory_space<vmem>>, vector<1x32xf32>
    %c17 = arith.constant 17 : index
    %c0_80 = arith.constant 0 : index
    %258 = vector.load %arg1[%c17, %c0_80] : memref<22x128xf32, #tpu.memory_space<vmem>>, vector<1x32xf32>
    %cst_81 = arith.constant dense<0.000000e+00> : vector<16xf32>
    %259 = vector.multi_reduction <add>, %256, %cst_81 [1] : vector<16x32xf32> to vector<16xf32>
    %260 = vector.shape_cast %259 : vector<16xf32> to vector<16x1xf32>
    %cst_82 = arith.constant 3.200000e+01 : f32
    %261 = vector.broadcast %cst_82 : f32 to vector<16x1xf32>
    %262 = arith.divf %260, %261 : vector<16x1xf32>
    %263 = vector.broadcast %262 : vector<16x1xf32> to vector<16x32xf32>
    %264 = arith.subf %256, %263 : vector<16x32xf32>
    %265 = arith.mulf %264, %264 : vector<16x32xf32>
    %cst_83 = arith.constant dense<0.000000e+00> : vector<16xf32>
    %266 = vector.multi_reduction <add>, %265, %cst_83 [1] : vector<16x32xf32> to vector<16xf32>
    %267 = vector.shape_cast %266 : vector<16xf32> to vector<16x1xf32>
    %cst_84 = arith.constant 3.200000e+01 : f32
    %268 = vector.broadcast %cst_84 : f32 to vector<16x1xf32>
    %269 = arith.divf %267, %268 : vector<16x1xf32>
    %270 = vector.broadcast %262 : vector<16x1xf32> to vector<16x32xf32>
    %271 = arith.subf %256, %270 : vector<16x32xf32>
    %cst_85 = arith.constant 9.99999996E-13 : f32
    %272 = vector.broadcast %cst_85 : f32 to vector<16x1xf32>
    %273 = arith.addf %269, %272 : vector<16x1xf32>
    %274 = math.rsqrt %273 : vector<16x1xf32>
    %275 = vector.broadcast %274 : vector<16x1xf32> to vector<16x32xf32>
    %276 = arith.mulf %271, %275 : vector<16x32xf32>
    %277 = vector.broadcast %257 : vector<1x32xf32> to vector<16x32xf32>
    %278 = arith.mulf %276, %277 : vector<16x32xf32>
    %279 = vector.broadcast %258 : vector<1x32xf32> to vector<16x32xf32>
    %280 = arith.addf %278, %279 : vector<16x32xf32>
    %c320 = arith.constant 320 : index
    %c0_86 = arith.constant 0 : index
    %281 = vector.load %arg2[%c320, %c0_86] : memref<384x128xbf16, #tpu.memory_space<vmem>>, vector<32x32xbf16>
    %282 = arith.truncf %280 : vector<16x32xf32> to vector<16x32xbf16>
    %cst_87 = arith.constant dense<0.000000e+00> : vector<16x32xf32>
    %283 = tpu.matmul %282, %281, %cst_87 {dimension_numbers = #tpu.dot_dimension_numbers<[1], [0], [0], [1], [0, 0, 1, 1], [], []>} : vector<16x32xbf16>, vector<32x32xbf16>, vector<16x32xf32> -> vector<16x32xf32>
    %c18 = arith.constant 18 : index
    %c0_88 = arith.constant 0 : index
    %284 = vector.load %arg1[%c18, %c0_88] : memref<22x128xf32, #tpu.memory_space<vmem>>, vector<1x32xf32>
    %285 = vector.broadcast %284 : vector<1x32xf32> to vector<16x32xf32>
    %286 = arith.addf %283, %285 : vector<16x32xf32>
    %cst_89 = arith.constant 5.000000e-01 : f32
    %287 = vector.broadcast %cst_89 : f32 to vector<16x32xf32>
    %288 = arith.mulf %287, %286 : vector<16x32xf32>
    %cst_90 = arith.constant 1.41421354 : f32
    %289 = vector.broadcast %cst_90 : f32 to vector<16x32xf32>
    %290 = arith.divf %286, %289 : vector<16x32xf32>
    %291 = math.erf %290 : vector<16x32xf32>
    %cst_91 = arith.constant 1.000000e+00 : f32
    %292 = vector.broadcast %cst_91 : f32 to vector<16x32xf32>
    %293 = arith.addf %292, %291 : vector<16x32xf32>
    %294 = arith.mulf %288, %293 : vector<16x32xf32>
    %c19 = arith.constant 19 : index
    %c0_92 = arith.constant 0 : index
    %295 = vector.load %arg1[%c19, %c0_92] : memref<22x128xf32, #tpu.memory_space<vmem>>, vector<1x32xf32>
    %c20 = arith.constant 20 : index
    %c0_93 = arith.constant 0 : index
    %296 = vector.load %arg1[%c20, %c0_93] : memref<22x128xf32, #tpu.memory_space<vmem>>, vector<1x32xf32>
    %cst_94 = arith.constant dense<0.000000e+00> : vector<16xf32>
    %297 = vector.multi_reduction <add>, %294, %cst_94 [1] : vector<16x32xf32> to vector<16xf32>
    %298 = vector.shape_cast %297 : vector<16xf32> to vector<16x1xf32>
    %cst_95 = arith.constant 3.200000e+01 : f32
    %299 = vector.broadcast %cst_95 : f32 to vector<16x1xf32>
    %300 = arith.divf %298, %299 : vector<16x1xf32>
    %301 = vector.broadcast %300 : vector<16x1xf32> to vector<16x32xf32>
    %302 = arith.subf %294, %301 : vector<16x32xf32>
    %303 = arith.mulf %302, %302 : vector<16x32xf32>
    %cst_96 = arith.constant dense<0.000000e+00> : vector<16xf32>
    %304 = vector.multi_reduction <add>, %303, %cst_96 [1] : vector<16x32xf32> to vector<16xf32>
    %305 = vector.shape_cast %304 : vector<16xf32> to vector<16x1xf32>
    %cst_97 = arith.constant 3.200000e+01 : f32
    %306 = vector.broadcast %cst_97 : f32 to vector<16x1xf32>
    %307 = arith.divf %305, %306 : vector<16x1xf32>
    %308 = vector.broadcast %300 : vector<16x1xf32> to vector<16x32xf32>
    %309 = arith.subf %294, %308 : vector<16x32xf32>
    %cst_98 = arith.constant 9.99999996E-13 : f32
    %310 = vector.broadcast %cst_98 : f32 to vector<16x1xf32>
    %311 = arith.addf %307, %310 : vector<16x1xf32>
    %312 = math.rsqrt %311 : vector<16x1xf32>
    %313 = vector.broadcast %312 : vector<16x1xf32> to vector<16x32xf32>
    %314 = arith.mulf %309, %313 : vector<16x32xf32>
    %315 = vector.broadcast %295 : vector<1x32xf32> to vector<16x32xf32>
    %316 = arith.mulf %314, %315 : vector<16x32xf32>
    %317 = vector.broadcast %296 : vector<1x32xf32> to vector<16x32xf32>
    %318 = arith.addf %316, %317 : vector<16x32xf32>
    %c352 = arith.constant 352 : index
    %c0_99 = arith.constant 0 : index
    %319 = vector.load %arg2[%c352, %c0_99] : memref<384x128xbf16, #tpu.memory_space<vmem>>, vector<32x128xbf16>
    %320 = arith.truncf %318 : vector<16x32xf32> to vector<16x32xbf16>
    %cst_100 = arith.constant dense<0.000000e+00> : vector<16x128xf32>
    %321 = tpu.matmul %320, %319, %cst_100 {dimension_numbers = #tpu.dot_dimension_numbers<[1], [0], [0], [1], [0, 0, 1, 1], [], []>} : vector<16x32xbf16>, vector<32x128xbf16>, vector<16x128xf32> -> vector<16x128xf32>
    %c21 = arith.constant 21 : index
    %c0_101 = arith.constant 0 : index
    %322 = vector.load %arg1[%c21, %c0_101] : memref<22x128xf32, #tpu.memory_space<vmem>>, vector<1x128xf32>
    %323 = vector.broadcast %322 : vector<1x128xf32> to vector<16x128xf32>
    %324 = arith.addf %321, %323 : vector<16x128xf32>
    %c0_102 = arith.constant 0 : index
    %c0_103 = arith.constant 0 : index
    %325 = vector.load %arg4[%c0_102, %c0_103] : memref<16x128xf32, #tpu.memory_space<vmem>>, vector<16x128xf32>
    tpu.vector_store %arg4[%c0_102, %c0_103], %324 {strides = array<i32>} : memref<16x128xf32, #tpu.memory_space<vmem>>, vector<16x128xf32>,
    %c0_104 = arith.constant 0 : index
    %c0_105 = arith.constant 0 : index
    %326 = vector.load %arg3[%c0_104, %c0_105] : memref<16x128xf32, #tpu.memory_space<vmem>>, vector<16x128xf32>
    %cst_106 = arith.constant dense<0xFF800000> : vector<16xf32>
    %327 = vector.multi_reduction <maximumf>, %324, %cst_106 [1] : vector<16x128xf32> to vector<16xf32>
    %328 = vector.shape_cast %327 : vector<16xf32> to vector<16x1xf32>
    %329 = vector.broadcast %328 : vector<16x1xf32> to vector<16x128xf32>
    %330 = arith.subf %324, %329 : vector<16x128xf32>
    %331 = math.exp %330 : vector<16x128xf32>
    %cst_107 = arith.constant dense<0.000000e+00> : vector<16xf32>
    %332 = vector.multi_reduction <add>, %331, %cst_107 [1] : vector<16x128xf32> to vector<16xf32>
    %333 = vector.shape_cast %332 : vector<16xf32> to vector<16x1xf32>
    %334 = math.log %333 : vector<16x1xf32>
    %335 = arith.addf %334, %328 : vector<16x1xf32>
    %336 = arith.mulf %326, %324 : vector<16x128xf32>
    %cst_108 = arith.constant dense<0.000000e+00> : vector<16xf32>
    %337 = vector.multi_reduction <add>, %336, %cst_108 [1] : vector<16x128xf32> to vector<16xf32>
    %338 = vector.shape_cast %337 : vector<16xf32> to vector<16x1xf32>
    %cst_109 = arith.constant dense<0.000000e+00> : vector<16xf32>
    %339 = vector.multi_reduction <add>, %326, %cst_109 [1] : vector<16x128xf32> to vector<16xf32>
    %340 = vector.shape_cast %339 : vector<16xf32> to vector<16x1xf32>
    %341 = arith.subf %335, %338 : vector<16x1xf32>
    %342 = arith.mulf %341, %340 : vector<16x1xf32>
    %343 = vector.shape_cast %342 : vector<16x1xf32> to vector<1x16x1xf32>
    %cst_110 = arith.constant dense<0.000000e+00> : vector<1xf32>
    %344 = vector.multi_reduction <add>, %343, %cst_110 [1, 2] : vector<1x16x1xf32> to vector<1xf32>
    %345 = vector.shape_cast %344 : vector<1xf32> to vector<1x1x1xf32>
    %346 = vector.extract %345[0, 0, 0] : f32 from vector<1x1x1xf32>
    %347 = vector.shape_cast %340 : vector<16x1xf32> to vector<1x16x1xf32>
    %cst_111 = arith.constant dense<0.000000e+00> : vector<1xf32>
    %348 = vector.multi_reduction <add>, %347, %cst_111 [1, 2] : vector<1x16x1xf32> to vector<1xf32>
    %349 = vector.shape_cast %348 : vector<1xf32> to vector<1x1x1xf32>
    %350 = vector.extract %349[0, 0, 0] : f32 from vector<1x1x1xf32>
    %351 = arith.divf %346, %350 : f32
    %352 = vector.broadcast %351 : f32 to vector<1x1xf32>
    %c0_112 = arith.constant 0 : index
    %c0_113 = arith.constant 0 : index
    %353 = vector.load %arg5[%c0_112, %c0_113] : memref<1x1xf32, #tpu.memory_space<vmem>>, vector<1x1xf32>
    tpu.vector_store %arg5[%c0_112, %c0_113], %352 {strides = array<i32>} : memref<1x1xf32, #tpu.memory_space<vmem>>, vector<1x1xf32>,
    return
  }
}

</mosaic_0001>

<llo_original>
// kernel: bert_pred_forward.1
$region0: #{bert_pred_forward.1}
  #allocation0 [shape = 'u32[]', space=smem, size = 0x4, offset = 0x4, fixed_abs, tag = 'smem constant byte address 0x4 - core index']
  #allocation1 [shape = 'u32[144,128]{1,0:T(1,128)}', space=vmem, size = 0x12000, scoped, tag = 'internal scratch']
  %s0 = inlined_call_operand.vmem [shape: f32[16,32], index: 0, kind: input, shape index: {}]
  %s1 = inlined_call_operand.vmem [shape: f32[22,128], index: 1, kind: input, shape index: {}]
  %s2 = inlined_call_operand.vmem [shape: bf16[384,128], index: 2, kind: input, shape index: {}]
  %s3 = inlined_call_operand.vmem [shape: f32[16,128], index: 3, kind: input, shape index: {}]
  %s4 = inlined_call_operand.hbm [shape: f32[16,128], index: 4, kind: output, shape index: {0}]
  %s5 = inlined_call_operand.hbm [shape: f32[1,1], index: 5, kind: output, shape index: {1}]
  %6 = xla_tuple %s4, %s5
  %s7 = sld [smem:[#allocation0]]
  $region34: #{bert_pred_forward.1} parent=0
    _
  %s9 = ssub.s32 1, %s7
  %s10 = scalar_select 0, %s9, %s7
  $region1: #{bert_pred_forward.1} parent=0
    #allocation2 [shape = 'u8[8192]{0}', space=vmem, size = 0x2000, scoped, tag = 'output window, operand 0, single buffered']
    #allocation3 [shape = 's32[1]{0}', space=sflag, size = 0x4, scoped, tag = 'scoped memory for bert_pred_forward.1']
    #allocation4 [shape = 'u8[512]{0}', space=vmem, size = 0x400, scoped, tag = 'output window, operand 1, single buffered']
    #allocation5 [shape = 's32[1]{0}', space=sflag, size = 0x4, scoped, tag = 'scoped memory for bert_pred_forward.1']
    %11 = vsyncpa [#allocation3], 0
    %12 = vsyncpa [#allocation5], 0
    // Predicated region
    $region2: #{bert_pred_forward.1} parent=1 // pred_check
      _
    $region3: #{bert_pred_forward.1} parent=1 // pred_check_branch
      %14 = sbr.rel (0) target = $region5
    $region4: #{bert_pred_forward.1} parent=1 // pred_region
      _
    $region5: #{bert_pred_forward.1} parent=1 // pred_fallthru
      _
    // Predicated region
    $region6: #{bert_pred_forward.1} parent=1 // pred_check
      _
    $region7: #{bert_pred_forward.1} parent=1 // pred_check_branch
      %16 = sbr.rel (0) target = $region9
    $region8: #{bert_pred_forward.1} parent=1 // pred_region
      _
    $region9: #{bert_pred_forward.1} parent=1 // pred_fallthru
      _
    // Predicated region
    $region10: #{bert_pred_forward.1} parent=1 // pred_check
      _
    $region11: #{bert_pred_forward.1} parent=1 // pred_check_branch
      %18 = sbr.rel (0) target = $region13
    $region12: #{bert_pred_forward.1} parent=1 // pred_region
      _
    $region13: #{bert_pred_forward.1} parent=1 // pred_fallthru
      _
    // Predicated region
    $region14: #{bert_pred_forward.1} parent=1 // pred_check
      _
    $region15: #{bert_pred_forward.1} parent=1 // pred_check_branch
      %20 = sbr.rel (0) target = $region17
    $region16: #{bert_pred_forward.1} parent=1 // pred_region
      _
    $region17: #{bert_pred_forward.1} parent=1 // pred_fallthru
      _
    %v22 = vlaneseq
    %v23 = vshrl.u32 %v22, 7
    %v24 = vadd.s32 %v23, 8
    %v25 = vlaneseq
    %v26 = vand.u32 %v25, 127
    %v27 = vshra.s32 %v23, 3
    %v28 = vshra.s32 %v24, 3
    %v29 = vshra.s32 %v26, 3
    %vm30 = vcmp.eq.s32.totalorder %v27, %v29
    %vm31 = vcmp.eq.s32.totalorder %v28, %v29
    %v32 = vsel %vm30, 0.0, -1e+30
    %v33 = vsel %vm31, 0.0, -1e+30
    %v34 = vld [vmem:[%s0] sm:$0xff]
    %v35 = vld [vmem:[%s0 + $0x8] sm:$0xff]
    %v36 = vld [vmem:[%s1] sm:$0x1]
    %v37 = vld [vmem:[%s1 + $0x1] sm:$0x1]
    %vm38 = vcmask 261120
    %v39 = vsel %vm38, %v34, 0.0
    %40 = vadd.xlane.f32.xlu0 %v39
    %v41 = vpop.xlane.xlu0 %40
    %v42 = vsel %vm38, %v35, 0.0
    %43 = vadd.xlane.f32.xlu0 %v42
    %v44 = vpop.xlane.xlu0 %43
    %v45 = vrcp.pop 32.0
    %v46 = vmul.f32 %v41, %v45
    %v47 = vmul.f32 %v44, %v45
    %v48 = vsub.f32 %v34, %v46
    %v49 = vsub.f32 %v35, %v47
    %v50 = vmul.f32 %v48, %v48
    %v51 = vmul.f32 %v49, %v49
    %v52 = vsel %vm38, %v50, 0.0
    %53 = vadd.xlane.f32.xlu0 %v52
    %v54 = vpop.xlane.xlu0 %53
    %v55 = vsel %vm38, %v51, 0.0
    %56 = vadd.xlane.f32.xlu0 %v55
    %v57 = vpop.xlane.xlu0 %56
    %v58 = vmul.f32 %v54, %v45
    %v59 = vmul.f32 %v57, %v45
    %v60 = vadd.f32 %v58, 1e-12
    %v61 = vadd.f32 %v59, 1e-12
    %v62 = vrsqrt.pop %v60
    %v63 = vrsqrt.pop %v61
    %v64 = vmul.f32 %v48, %v62
    %v65 = vmul.f32 %v49, %v63
    %v66 = vlaneseq
    %v67 = vshrl.u32 %v66, 7
    %v68 = vsub.s32 0, %v67
    %v69 = vrot.slane %v36, %v68
    %v70 = vmul.f32 %v64, %v69
    %v71 = vmul.f32 %v65, %v69
    %v72 = vlaneseq
    %v73 = vshrl.u32 %v72, 7
    %v74 = vsub.s32 0, %v73
    %v75 = vrot.slane %v37, %v74
    %v76 = vadd.f32 %v70, %v75
    %v77 = vadd.f32 %v71, %v75
    %v78 = vld [vmem:[%s2] sm:$0xf]
    %v79 = vld [vmem:[%s2 + $0x4] sm:$0xf]
    %v80 = vld [vmem:[%s2 + $0x8] sm:$0xf]
    %v81 = vld [vmem:[%s2 + $0xc] sm:$0xf]
    %v82 = vpack.c.bf16 %v77, %v76
    %v83 = vld [vmem:[%s1 + $0x2] sm:$0x1]
    %v84 = vlaneseq
    %v85 = vshrl.u32 %v84, 7
    %v86 = vsub.s32 0, %v85
    %v87 = vrot.slane %v83, %v86
    %v92 = vunpack.c.l.b16 %v78
    %v93 = vunpack.c.l.b16 %v79
    %v94 = vunpack.c.l.b16 %v80
    %v95 = vunpack.c.l.b16 %v81
    %v96 = vpack.c.b16 %v93, %v92
    %v97 = vpack.c.b16 %v95, %v94
    %v101 = vsel %vm38, %v82, 0
    %103 = vmatprep.subr.bf16.mxu0 0
    %104 = vmatpush1.bf16.msra.mxu0 0
    %105 = vmatprep.subr.bf16.mxu0 0
    %106 = vmatpush1.bf16.msra.mxu0 0
    %107 = vmatprep.subr.bf16.mxu0 0
    %108 = vmatpush1.bf16.msra.mxu0 0
    %109 = vmatprep.subr.bf16.mxu0 0
    %110 = vmatpush1.bf16.msra.mxu0 0
    %111 = vmatprep.subr.bf16.mxu0 0
    %112 = vmatpush1.bf16.msra.mxu0 0
    %113 = vmatprep.subr.bf16.mxu0 0
    %114 = vmatpush1.bf16.msra.mxu0 0
    %115 = vmatprep.subr.bf16.mxu0 0
    %116 = vmatpush1.bf16.msra.mxu0 %v97
    %117 = vmatprep.subr.bf16.mxu0 0
    %118 = vmatpush1.bf16.msra.mxu0 %v96
    %119 = vmatprep.subr.bf16.mxu0 0
    %120 = vmatpush2.bf16.msra.mxu0 0
    %121 = vmatprep.subr.bf16.mxu0 0
    %122 = vmatpush2.bf16.msra.mxu0 0
    %123 = vmatprep.subr.bf16.mxu0 0
    %124 = vmatpush2.bf16.msra.mxu0 0
    %125 = vmatprep.subr.bf16.mxu0 0
    %126 = vmatpush2.bf16.msra.mxu0 0
    %127 = vmatprep.subr.bf16.mxu0 0
    %128 = vmatpush2.bf16.msra.mxu0 0
    %129 = vmatprep.subr.bf16.mxu0 0
    %130 = vmatpush2.bf16.msra.mxu0 0
    %131 = vmatprep.subr.bf16.mxu0 0
    %132 = vmatpush2.bf16.msra.mxu0 0
    %133 = vmatprep.subr.bf16.mxu0 0
    %134 = vmatpush2.bf16.msra.mxu0 0
    %135 = vmatprep.mubr.bf16.mxu0 0
    %136 = vmatmul.mubr.bf16.gmra.mxu0 %v101
    %v137 = vpop.f32.mrf.mxu0
    %v138 = vadd.f32 %v87, %v137
    %v139 = vpop.f32.mrf.mxu0
    %v140 = vpop.f32.mrf.mxu0
    %v141 = vadd.f32 %v87, %v140
    %v142 = vpop.f32.mrf.mxu0
    %143 = vdwg.mxu0
    %v144 = vpack.c.bf16 %v141, %v138
    %146 = vrot.lane.b32.xlu0 %v144, 96
    %v147 = vpop.permute.xlu0 %146
    %vm148 = vcmask 130048
    %v150 = vsel %vm148, %v144, 0
    %v153 = vsel %vm148, %v147, 0
    %155 = vmatprep.subr.bf16.mxu0 0
    %156 = vmatpush1.bf16.xpose.msra.mxu0 0
    %157 = vmatprep.subr.bf16.mxu0 0
    %158 = vmatpush1.bf16.xpose.msra.mxu0 0
    %159 = vmatprep.subr.bf16.mxu0 0
    %160 = vmatpush1.bf16.xpose.msra.mxu0 0
    %161 = vmatprep.subr.bf16.mxu0 0
    %162 = vmatpush1.bf16.xpose.msra.mxu0 0
    %163 = vmatprep.subr.bf16.mxu0 0
    %164 = vmatpush1.bf16.xpose.msra.mxu0 0
    %165 = vmatprep.subr.bf16.mxu0 0
    %166 = vmatpush1.bf16.xpose.msra.mxu0 0
    %167 = vmatprep.subr.bf16.mxu0 0
    %168 = vmatpush1.bf16.xpose.msra.mxu0 0
    %169 = vmatprep.subr.bf16.mxu0 0
    %170 = vmatpush1.bf16.xpose.msra.mxu0 %v153
    %171 = vmatprep.subr.bf16.mxu0 0
    %172 = vmatpush2.bf16.xpose.msra.mxu0 0
    %173 = vmatprep.subr.bf16.mxu0 0
    %174 = vmatpush2.bf16.xpose.msra.mxu0 0
    %175 = vmatprep.subr.bf16.mxu0 0
    %176 = vmatpush2.bf16.xpose.msra.mxu0 0
    %177 = vmatprep.subr.bf16.mxu0 0
    %178 = vmatpush2.bf16.xpose.msra.mxu0 0
    %179 = vmatprep.subr.bf16.mxu0 0
    %180 = vmatpush2.bf16.xpose.msra.mxu0 0
    %181 = vmatprep.subr.bf16.mxu0 0
    %182 = vmatpush2.bf16.xpose.msra.mxu0 0
    %183 = vmatprep.subr.bf16.mxu0 0
    %184 = vmatpush2.bf16.xpose.msra.mxu0 0
    %185 = vmatprep.subr.bf16.mxu0 0
    %186 = vmatpush2.bf16.xpose.msra.mxu0 0
    %187 = vmatprep.mubr.bf16.mxu0 0
    %188 = vmatmul.mubr.bf16.gmra.mxu0 %v150
    %v189 = vpop.f32.mrf.mxu0
    %v190 = vadd.f32 %v32, %v189
    %v191 = vpop.f32.mrf.mxu0
    %v192 = vpop.f32.mrf.mxu0
    %v193 = vadd.f32 %v33, %v192
    %v194 = vpop.f32.mrf.mxu0
    %195 = vdwg.mxu0
    %v196 = vsel %vm148, %v190, -inf
    %197 = vmax.xlane.f32.xlu0 %v196
    %v198 = vpop.xlane.xlu0 %197
    %v199 = vsel %vm148, %v193, -inf
    %200 = vmax.xlane.f32.xlu0 %v199
    %v201 = vpop.xlane.xlu0 %200
    %v202 = vsub.f32 %v190, %v198
    %v203 = vsub.f32 %v193, %v201
    %v204 = vmul.f32 %v202, 1.442695
    %v205 = vpow.pop %v204
    %v206 = vmul.f32 %v203, 1.442695
    %v207 = vpow.pop %v206
    %v208 = vsel %vm148, %v205, 0.0
    %209 = vadd.xlane.f32.xlu0 %v208
    %v210 = vpop.xlane.xlu0 %209
    %v211 = vsel %vm148, %v207, 0.0
    %212 = vadd.xlane.f32.xlu0 %v211
    %v213 = vpop.xlane.xlu0 %212
    %v214 = vrcp.pop %v210
    %v215 = vrcp.pop %v213
    %v216 = vmul.f32 %v205, %v214
    %v217 = vmul.f32 %v207, %v215
    %v218 = vpack.c.bf16 %v217, %v216
    %219 = vrot.lane.b32.xlu0 %v144, 64
    %v220 = vpop.permute.xlu0 %219
    %v223 = vsel %vm148, %v218, 0
    %225 = vmatprep.subr.bf16.mxu0 0
    %226 = vmatpush1.bf16.msra.mxu0 0
    %227 = vmatprep.subr.bf16.mxu0 0
    %228 = vmatpush1.bf16.msra.mxu0 0
    %229 = vmatprep.subr.bf16.mxu0 0
    %230 = vmatpush1.bf16.msra.mxu0 0
    %231 = vmatprep.subr.bf16.mxu0 0
    %232 = vmatpush1.bf16.msra.mxu0 0
    %233 = vmatprep.subr.bf16.mxu0 0
    %234 = vmatpush1.bf16.msra.mxu0 0
    %235 = vmatprep.subr.bf16.mxu0 0
    %236 = vmatpush1.bf16.msra.mxu0 0
    %237 = vmatprep.subr.bf16.mxu0 0
    %238 = vmatpush1.bf16.msra.mxu0 0
    %239 = vmatprep.subr.bf16.mxu0 0
    %240 = vmatpush1.bf16.msra.mxu0 %v220
    %241 = vmatprep.subr.bf16.mxu0 0
    %242 = vmatpush2.bf16.msra.mxu0 0
    %243 = vmatprep.subr.bf16.mxu0 0
    %244 = vmatpush2.bf16.msra.mxu0 0
    %245 = vmatprep.subr.bf16.mxu0 0
    %246 = vmatpush2.bf16.msra.mxu0 0
    %247 = vmatprep.subr.bf16.mxu0 0
    %248 = vmatpush2.bf16.msra.mxu0 0
    %249 = vmatprep.subr.bf16.mxu0 0
    %250 = vmatpush2.bf16.msra.mxu0 0
    %251 = vmatprep.subr.bf16.mxu0 0
    %252 = vmatpush2.bf16.msra.mxu0 0
    %253 = vmatprep.subr.bf16.mxu0 0
    %254 = vmatpush2.bf16.msra.mxu0 0
    %255 = vmatprep.subr.bf16.mxu0 0
    %256 = vmatpush2.bf16.msra.mxu0 0
    %257 = vmatprep.mubr.bf16.mxu0 0
    %258 = vmatmul.mubr.bf16.gmra.mxu0 %v223
    %v259 = vpop.f32.mrf.mxu0
    %v260 = vadd.f32 0.0, %v259
    %v261 = vpop.f32.mrf.mxu0
    %v262 = vpop.f32.mrf.mxu0
    %v263 = vadd.f32 0.0, %v262
    %v264 = vpop.f32.mrf.mxu0
    %265 = vdwg.mxu0
    %266 = vrot.lane.b32.xlu0 %v144, 112
    %v267 = vpop.permute.xlu0 %266
    %268 = vrot.lane.b32.xlu0 %v144, 80
    %v269 = vpop.permute.xlu0 %268
    %v271 = vsel %vm148, %v267, 0
    %v274 = vsel %vm148, %v269, 0
    %276 = vmatprep.subr.bf16.mxu0 0
    %277 = vmatpush1.bf16.xpose.msra.mxu0 0
    %278 = vmatprep.subr.bf16.mxu0 0
    %279 = vmatpush1.bf16.xpose.msra.mxu0 0
    %280 = vmatprep.subr.bf16.mxu0 0
    %281 = vmatpush1.bf16.xpose.msra.mxu0 0
    %282 = vmatprep.subr.bf16.mxu0 0
    %283 = vmatpush1.bf16.xpose.msra.mxu0 0
    %284 = vmatprep.subr.bf16.mxu0 0
    %285 = vmatpush1.bf16.xpose.msra.mxu0 0
    %286 = vmatprep.subr.bf16.mxu0 0
    %287 = vmatpush1.bf16.xpose.msra.mxu0 0
    %288 = vmatprep.subr.bf16.mxu0 0
    %289 = vmatpush1.bf16.xpose.msra.mxu0 0
    %290 = vmatprep.subr.bf16.mxu0 0
    %291 = vmatpush1.bf16.xpose.msra.mxu0 %v274
    %292 = vmatprep.subr.bf16.mxu0 0
    %293 = vmatpush2.bf16.xpose.msra.mxu0 0
    %294 = vmatprep.subr.bf16.mxu0 0
    %295 = vmatpush2.bf16.xpose.msra.mxu0 0
    %296 = vmatprep.subr.bf16.mxu0 0
    %297 = vmatpush2.bf16.xpose.msra.mxu0 0
    %298 = vmatprep.subr.bf16.mxu0 0
    %299 = vmatpush2.bf16.xpose.msra.mxu0 0
    %300 = vmatprep.subr.bf16.mxu0 0
    %301 = vmatpush2.bf16.xpose.msra.mxu0 0
    %302 = vmatprep.subr.bf16.mxu0 0
    %303 = vmatpush2.bf16.xpose.msra.mxu0 0
    %304 = vmatprep.subr.bf16.mxu0 0
    %305 = vmatpush2.bf16.xpose.msra.mxu0 0
    %306 = vmatprep.subr.bf16.mxu0 0
    %307 = vmatpush2.bf16.xpose.msra.mxu0 0
    %308 = vmatprep.mubr.bf16.mxu0 0
    %309 = vmatmul.mubr.bf16.gmra.mxu0 %v271
    %v310 = vpop.f32.mrf.mxu0
    %v311 = vadd.f32 %v32, %v310
    %v312 = vpop.f32.mrf.mxu0
    %v313 = vpop.f32.mrf.mxu0
    %v314 = vadd.f32 %v33, %v313
    %v315 = vpop.f32.mrf.mxu0
    %316 = vdwg.mxu0
    %v317 = vsel %vm148, %v311, -inf
    %318 = vmax.xlane.f32.xlu0 %v317
    %v319 = vpop.xlane.xlu0 %318
    %v320 = vsel %vm148, %v314, -inf
    %321 = vmax.xlane.f32.xlu0 %v320
    %v322 = vpop.xlane.xlu0 %321
    %v323 = vsub.f32 %v311, %v319
    %v324 = vsub.f32 %v314, %v322
    %v325 = vmul.f32 %v323, 1.442695
    %v326 = vpow.pop %v325
    %v327 = vmul.f32 %v324, 1.442695
    %v328 = vpow.pop %v327
    %v329 = vsel %vm148, %v326, 0.0
    %330 = vadd.xlane.f32.xlu0 %v329
    %v331 = vpop.xlane.xlu0 %330
    %v332 = vsel %vm148, %v328, 0.0
    %333 = vadd.xlane.f32.xlu0 %v332
    %v334 = vpop.xlane.xlu0 %333
    %v335 = vrcp.pop %v331
    %v336 = vrcp.pop %v334
    %v337 = vmul.f32 %v326, %v335
    %v338 = vmul.f32 %v328, %v336
    %v339 = vpack.c.bf16 %v338, %v337
    %340 = vrot.lane.b32.xlu0 %v144, 48
    %v341 = vpop.permute.xlu0 %340
    %v344 = vsel %vm148, %v339, 0
    %346 = vmatprep.subr.bf16.mxu0 0
    %347 = vmatpush1.bf16.msra.mxu0 0
    %348 = vmatprep.subr.bf16.mxu0 0
    %349 = vmatpush1.bf16.msra.mxu0 0
    %350 = vmatprep.subr.bf16.mxu0 0
    %351 = vmatpush1.bf16.msra.mxu0 0
    %352 = vmatprep.subr.bf16.mxu0 0
    %353 = vmatpush1.bf16.msra.mxu0 0
    %354 = vmatprep.subr.bf16.mxu0 0
    %355 = vmatpush1.bf16.msra.mxu0 0
    %356 = vmatprep.subr.bf16.mxu0 0
    %357 = vmatpush1.bf16.msra.mxu0 0
    %358 = vmatprep.subr.bf16.mxu0 0
    %359 = vmatpush1.bf16.msra.mxu0 0
    %360 = vmatprep.subr.bf16.mxu0 0
    %361 = vmatpush1.bf16.msra.mxu0 %v341
    %362 = vmatprep.subr.bf16.mxu0 0
    %363 = vmatpush2.bf16.msra.mxu0 0
    %364 = vmatprep.subr.bf16.mxu0 0
    %365 = vmatpush2.bf16.msra.mxu0 0
    %366 = vmatprep.subr.bf16.mxu0 0
    %367 = vmatpush2.bf16.msra.mxu0 0
    %368 = vmatprep.subr.bf16.mxu0 0
    %369 = vmatpush2.bf16.msra.mxu0 0
    %370 = vmatprep.subr.bf16.mxu0 0
    %371 = vmatpush2.bf16.msra.mxu0 0
    %372 = vmatprep.subr.bf16.mxu0 0
    %373 = vmatpush2.bf16.msra.mxu0 0
    %374 = vmatprep.subr.bf16.mxu0 0
    %375 = vmatpush2.bf16.msra.mxu0 0
    %376 = vmatprep.subr.bf16.mxu0 0
    %377 = vmatpush2.bf16.msra.mxu0 0
    %378 = vmatprep.mubr.bf16.mxu0 0
    %379 = vmatmul.mubr.bf16.gmra.mxu0 %v344
    %v380 = vpop.f32.mrf.mxu0
    %v381 = vadd.f32 0.0, %v380
    %v382 = vpop.f32.mrf.mxu0
    %v383 = vpop.f32.mrf.mxu0
    %v384 = vadd.f32 0.0, %v383
    %v385 = vpop.f32.mrf.mxu0
    %386 = vdwg.mxu0
    %389 = vrot.lane.b32.xlu0 %v381, 16
    %v390 = vpop.permute.xlu0 %389
    %391 = vrot.lane.b32.xlu0 %v384, 16
    %v392 = vpop.permute.xlu0 %391
    %v395 = vsel %vm148, %v260, %v390
    %v396 = vsel %vm148, %v263, %v392
    %v397 = vld [vmem:[%s2 + $0x10] sm:$0xf]
    %v398 = vld [vmem:[%s2 + $0x14] sm:$0xf]
    %v399 = vld [vmem:[%s2 + $0x18] sm:$0xf]
    %v400 = vld [vmem:[%s2 + $0x1c] sm:$0xf]
    %v401 = vpack.c.bf16 %v396, %v395
    %v402 = vld [vmem:[%s1 + $0x3] sm:$0x1]
    %v403 = vlaneseq
    %v404 = vshrl.u32 %v403, 7
    %v405 = vsub.s32 0, %v404
    %v406 = vrot.slane %v402, %v405
    %v411 = vunpack.c.l.b16 %v397
    %v412 = vunpack.c.l.b16 %v398
    %v413 = vunpack.c.l.b16 %v399
    %v414 = vunpack.c.l.b16 %v400
    %v415 = vpack.c.b16 %v412, %v411
    %v416 = vpack.c.b16 %v414, %v413
    %v420 = vsel %vm38, %v401, 0
    %422 = vmatprep.subr.bf16.mxu0 0
    %423 = vmatpush1.bf16.msra.mxu0 0
    %424 = vmatprep.subr.bf16.mxu0 0
    %425 = vmatpush1.bf16.msra.mxu0 0
    %426 = vmatprep.subr.bf16.mxu0 0
    %427 = vmatpush1.bf16.msra.mxu0 0
    %428 = vmatprep.subr.bf16.mxu0 0
    %429 = vmatpush1.bf16.msra.mxu0 0
    %430 = vmatprep.subr.bf16.mxu0 0
    %431 = vmatpush1.bf16.msra.mxu0 0
    %432 = vmatprep.subr.bf16.mxu0 0
    %433 = vmatpush1.bf16.msra.mxu0 0
    %434 = vmatprep.subr.bf16.mxu0 0
    %435 = vmatpush1.bf16.msra.mxu0 %v416
    %436 = vmatprep.subr.bf16.mxu0 0
    %437 = vmatpush1.bf16.msra.mxu0 %v415
    %438 = vmatprep.subr.bf16.mxu0 0
    %439 = vmatpush2.bf16.msra.mxu0 0
    %440 = vmatprep.subr.bf16.mxu0 0
    %441 = vmatpush2.bf16.msra.mxu0 0
    %442 = vmatprep.subr.bf16.mxu0 0
    %443 = vmatpush2.bf16.msra.mxu0 0
    %444 = vmatprep.subr.bf16.mxu0 0
    %445 = vmatpush2.bf16.msra.mxu0 0
    %446 = vmatprep.subr.bf16.mxu0 0
    %447 = vmatpush2.bf16.msra.mxu0 0
    %448 = vmatprep.subr.bf16.mxu0 0
    %449 = vmatpush2.bf16.msra.mxu0 0
    %450 = vmatprep.subr.bf16.mxu0 0
    %451 = vmatpush2.bf16.msra.mxu0 0
    %452 = vmatprep.subr.bf16.mxu0 0
    %453 = vmatpush2.bf16.msra.mxu0 0
    %454 = vmatprep.mubr.bf16.mxu0 0
    %455 = vmatmul.mubr.bf16.gmra.mxu0 %v420
    %v456 = vpop.f32.mrf.mxu0
    %v457 = vadd.f32 %v406, %v456
    %v458 = vpop.f32.mrf.mxu0
    %v459 = vpop.f32.mrf.mxu0
    %v460 = vadd.f32 %v406, %v459
    %v461 = vpop.f32.mrf.mxu0
    %462 = vdwg.mxu0
    %v463 = vadd.f32 %v76, %v457
    %v464 = vadd.f32 %v77, %v460
    %v465 = vld [vmem:[%s1 + $0x4] sm:$0x1]
    %v466 = vld [vmem:[%s1 + $0x5] sm:$0x1]
    %v467 = vsel %vm38, %v463, 0.0
    %468 = vadd.xlane.f32.xlu0 %v467
    %v469 = vpop.xlane.xlu0 %468
    %v470 = vsel %vm38, %v464, 0.0
    %471 = vadd.xlane.f32.xlu0 %v470
    %v472 = vpop.xlane.xlu0 %471
    %v473 = vmul.f32 %v469, %v45
    %v474 = vmul.f32 %v472, %v45
    %v475 = vsub.f32 %v463, %v473
    %v476 = vsub.f32 %v464, %v474
    %v477 = vmul.f32 %v475, %v475
    %v478 = vmul.f32 %v476, %v476
    %v479 = vsel %vm38, %v477, 0.0
    %480 = vadd.xlane.f32.xlu0 %v479
    %v481 = vpop.xlane.xlu0 %480
    %v482 = vsel %vm38, %v478, 0.0
    %483 = vadd.xlane.f32.xlu0 %v482
    %v484 = vpop.xlane.xlu0 %483
    %v485 = vmul.f32 %v481, %v45
    %v486 = vmul.f32 %v484, %v45
    %v487 = vadd.f32 %v485, 1e-12
    %v488 = vadd.f32 %v486, 1e-12
    %v489 = vrsqrt.pop %v487
    %v490 = vrsqrt.pop %v488
    %v491 = vmul.f32 %v475, %v489
    %v492 = vmul.f32 %v476, %v490
    %v493 = vlaneseq
    %v494 = vshrl.u32 %v493, 7
    %v495 = vsub.s32 0, %v494
    %v496 = vrot.slane %v465, %v495
    %v497 = vmul.f32 %v491, %v496
    %v498 = vmul.f32 %v492, %v496
    %v499 = vlaneseq
    %v500 = vshrl.u32 %v499, 7
    %v501 = vsub.s32 0, %v500
    %v502 = vrot.slane %v466, %v501
    %v503 = vadd.f32 %v497, %v502
    %v504 = vadd.f32 %v498, %v502
    %v505 = vld [vmem:[%s2 + $0x20] sm:$0xf]
    %v506 = vld [vmem:[%s2 + $0x24] sm:$0xf]
    %v507 = vld [vmem:[%s2 + $0x28] sm:$0xf]
    %v508 = vld [vmem:[%s2 + $0x2c] sm:$0xf]
    %v509 = vpack.c.bf16 %v504, %v503
    %v510 = vld [vmem:[%s1 + $0x6] sm:$0x1]
    %v511 = vlaneseq
    %v512 = vshrl.u32 %v511, 7
    %v513 = vsub.s32 0, %v512
    %v514 = vrot.slane %v510, %v513
    %v519 = vunpack.c.l.b16 %v505
    %v520 = vunpack.c.l.b16 %v506
    %v521 = vunpack.c.l.b16 %v507
    %v522 = vunpack.c.l.b16 %v508
    %v523 = vpack.c.b16 %v520, %v519
    %v524 = vpack.c.b16 %v522, %v521
    %v528 = vsel %vm38, %v509, 0
    %530 = vmatprep.subr.bf16.mxu0 0
    %531 = vmatpush1.bf16.msra.mxu0 0
    %532 = vmatprep.subr.bf16.mxu0 0
    %533 = vmatpush1.bf16.msra.mxu0 0
    %534 = vmatprep.subr.bf16.mxu0 0
    %535 = vmatpush1.bf16.msra.mxu0 0
    %536 = vmatprep.subr.bf16.mxu0 0
    %537 = vmatpush1.bf16.msra.mxu0 0
    %538 = vmatprep.subr.bf16.mxu0 0
    %539 = vmatpush1.bf16.msra.mxu0 0
    %540 = vmatprep.subr.bf16.mxu0 0
    %541 = vmatpush1.bf16.msra.mxu0 0
    %542 = vmatprep.subr.bf16.mxu0 0
    %543 = vmatpush1.bf16.msra.mxu0 %v524
    %544 = vmatprep.subr.bf16.mxu0 0
    %545 = vmatpush1.bf16.msra.mxu0 %v523
    %546 = vmatprep.subr.bf16.mxu0 0
    %547 = vmatpush2.bf16.msra.mxu0 0
    %548 = vmatprep.subr.bf16.mxu0 0
    %549 = vmatpush2.bf16.msra.mxu0 0
    %550 = vmatprep.subr.bf16.mxu0 0
    %551 = vmatpush2.bf16.msra.mxu0 0
    %552 = vmatprep.subr.bf16.mxu0 0
    %553 = vmatpush2.bf16.msra.mxu0 0
    %554 = vmatprep.subr.bf16.mxu0 0
    %555 = vmatpush2.bf16.msra.mxu0 0
    %556 = vmatprep.subr.bf16.mxu0 0
    %557 = vmatpush2.bf16.msra.mxu0 0
    %558 = vmatprep.subr.bf16.mxu0 0
    %559 = vmatpush2.bf16.msra.mxu0 0
    %560 = vmatprep.subr.bf16.mxu0 0
    %561 = vmatpush2.bf16.msra.mxu0 0
    %562 = vmatprep.mubr.bf16.mxu0 0
    %563 = vmatmul.mubr.bf16.gmra.mxu0 %v528
    %v564 = vpop.f32.mrf.mxu0
    %v565 = vadd.f32 %v514, %v564
    %v566 = vpop.f32.mrf.mxu0
    %v567 = vpop.f32.mrf.mxu0
    %v568 = vadd.f32 %v514, %v567
    %v569 = vpop.f32.mrf.mxu0
    %570 = vdwg.mxu0
    %v571 = vmul.f32 %v565, 0.5
    %v572 = vmul.f32 %v568, 0.5
    %v573 = vrcp.pop 1.4142135
    %v574 = vmul.f32 %v565, %v573
    %v575 = vmul.f32 %v568, %v573
    %v576 = verf.f32.pop %v574
    %v577 = verf.f32.pop %v575
    %v578 = vadd.f32 %v576, 1.0
    %v579 = vadd.f32 %v577, 1.0
    %v580 = vmul.f32 %v571, %v578
    %v581 = vmul.f32 %v572, %v579
    %v582 = vld [vmem:[%s2 + $0x30] sm:$0xf]
    %v583 = vld [vmem:[%s2 + $0x34] sm:$0xf]
    %v584 = vld [vmem:[%s2 + $0x38] sm:$0xf]
    %v585 = vld [vmem:[%s2 + $0x3c] sm:$0xf]
    %v586 = vld [vmem:[%s2 + $0x40] sm:$0xf]
    %v587 = vld [vmem:[%s2 + $0x44] sm:$0xf]
    %v588 = vld [vmem:[%s2 + $0x48] sm:$0xf]
    %v589 = vld [vmem:[%s2 + $0x4c] sm:$0xf]
    %v590 = vpack.c.bf16 %v581, %v580
    %v591 = vld [vmem:[%s1 + $0x7] sm:$0x1]
    %v592 = vlaneseq
    %v593 = vshrl.u32 %v592, 7
    %v594 = vsub.s32 0, %v593
    %v595 = vrot.slane %v591, %v594
    %v604 = vunpack.c.l.b16 %v582
    %v605 = vunpack.c.l.b16 %v583
    %v606 = vunpack.c.l.b16 %v584
    %v607 = vunpack.c.l.b16 %v585
    %v608 = vunpack.c.l.b16 %v586
    %v609 = vunpack.c.l.b16 %v587
    %v610 = vunpack.c.l.b16 %v588
    %v611 = vunpack.c.l.b16 %v589
    %v612 = vpack.c.b16 %v605, %v604
    %v613 = vpack.c.b16 %v607, %v606
    %v614 = vpack.c.b16 %v609, %v608
    %v615 = vpack.c.b16 %v611, %v610
    %vm620 = vcmask 523264
    %v622 = vsel %vm620, %v590, 0
    %624 = vmatprep.subr.bf16.mxu0 0
    %625 = vmatpush1.bf16.msra.mxu0 0
    %626 = vmatprep.subr.bf16.mxu0 0
    %627 = vmatpush1.bf16.msra.mxu0 0
    %628 = vmatprep.subr.bf16.mxu0 0
    %629 = vmatpush1.bf16.msra.mxu0 0
    %630 = vmatprep.subr.bf16.mxu0 0
    %631 = vmatpush1.bf16.msra.mxu0 0
    %632 = vmatprep.subr.bf16.mxu0 0
    %633 = vmatpush1.bf16.msra.mxu0 %v615
    %634 = vmatprep.subr.bf16.mxu0 0
    %635 = vmatpush1.bf16.msra.mxu0 %v614
    %636 = vmatprep.subr.bf16.mxu0 0
    %637 = vmatpush1.bf16.msra.mxu0 %v613
    %638 = vmatprep.subr.bf16.mxu0 0
    %639 = vmatpush1.bf16.msra.mxu0 %v612
    %640 = vmatprep.subr.bf16.mxu0 0
    %641 = vmatpush2.bf16.msra.mxu0 0
    %642 = vmatprep.subr.bf16.mxu0 0
    %643 = vmatpush2.bf16.msra.mxu0 0
    %644 = vmatprep.subr.bf16.mxu0 0
    %645 = vmatpush2.bf16.msra.mxu0 0
    %646 = vmatprep.subr.bf16.mxu0 0
    %647 = vmatpush2.bf16.msra.mxu0 0
    %648 = vmatprep.subr.bf16.mxu0 0
    %649 = vmatpush2.bf16.msra.mxu0 0
    %650 = vmatprep.subr.bf16.mxu0 0
    %651 = vmatpush2.bf16.msra.mxu0 0
    %652 = vmatprep.subr.bf16.mxu0 0
    %653 = vmatpush2.bf16.msra.mxu0 0
    %654 = vmatprep.subr.bf16.mxu0 0
    %655 = vmatpush2.bf16.msra.mxu0 0
    %656 = vmatprep.mubr.bf16.mxu0 0
    %657 = vmatmul.mubr.bf16.gmra.mxu0 %v622
    %v658 = vpop.f32.mrf.mxu0
    %v659 = vadd.f32 %v595, %v658
    %v660 = vpop.f32.mrf.mxu0
    %v661 = vpop.f32.mrf.mxu0
    %v662 = vadd.f32 %v595, %v661
    %v663 = vpop.f32.mrf.mxu0
    %664 = vdwg.mxu0
    %v665 = vadd.f32 %v503, %v659
    %v666 = vadd.f32 %v504, %v662
    %v667 = vld [vmem:[%s1 + $0x8] sm:$0x1]
    %v668 = vld [vmem:[%s1 + $0x9] sm:$0x1]
    %v669 = vsel %vm38, %v665, 0.0
    %670 = vadd.xlane.f32.xlu0 %v669
    %v671 = vpop.xlane.xlu0 %670
    %v672 = vsel %vm38, %v666, 0.0
    %673 = vadd.xlane.f32.xlu0 %v672
    %v674 = vpop.xlane.xlu0 %673
    %v675 = vmul.f32 %v671, %v45
    %v676 = vmul.f32 %v674, %v45
    %v677 = vsub.f32 %v665, %v675
    %v678 = vsub.f32 %v666, %v676
    %v679 = vmul.f32 %v677, %v677
    %v680 = vmul.f32 %v678, %v678
    %v681 = vsel %vm38, %v679, 0.0
    %682 = vadd.xlane.f32.xlu0 %v681
    %v683 = vpop.xlane.xlu0 %682
    %v684 = vsel %vm38, %v680, 0.0
    %685 = vadd.xlane.f32.xlu0 %v684
    %v686 = vpop.xlane.xlu0 %685
    %v687 = vmul.f32 %v683, %v45
    %v688 = vmul.f32 %v686, %v45
    %v689 = vadd.f32 %v687, 1e-12
    %v690 = vadd.f32 %v688, 1e-12
    %v691 = vrsqrt.pop %v689
    %v692 = vrsqrt.pop %v690
    %v693 = vmul.f32 %v677, %v691
    %v694 = vmul.f32 %v678, %v692
    %v695 = vlaneseq
    %v696 = vshrl.u32 %v695, 7
    %v697 = vsub.s32 0, %v696
    %v698 = vrot.slane %v667, %v697
    %v699 = vmul.f32 %v693, %v698
    %v700 = vmul.f32 %v694, %v698
    %v701 = vlaneseq
    %v702 = vshrl.u32 %v701, 7
    %v703 = vsub.s32 0, %v702
    %v704 = vrot.slane %v668, %v703
    %v705 = vadd.f32 %v699, %v704
    %v706 = vadd.f32 %v700, %v704
    %v707 = vld [vmem:[%s2 + $0x50] sm:$0xf]
    %v708 = vld [vmem:[%s2 + $0x54] sm:$0xf]
    %v709 = vld [vmem:[%s2 + $0x58] sm:$0xf]
    %v710 = vld [vmem:[%s2 + $0x5c] sm:$0xf]
    %v711 = vpack.c.bf16 %v706, %v705
    %v712 = vld [vmem:[%s1 + $0xa] sm:$0x1]
    %v713 = vlaneseq
    %v714 = vshrl.u32 %v713, 7
    %v715 = vsub.s32 0, %v714
    %v716 = vrot.slane %v712, %v715
    %v721 = vunpack.c.l.b16 %v707
    %v722 = vunpack.c.l.b16 %v708
    %v723 = vunpack.c.l.b16 %v709
    %v724 = vunpack.c.l.b16 %v710
    %v725 = vpack.c.b16 %v722, %v721
    %v726 = vpack.c.b16 %v724, %v723
    %v730 = vsel %vm38, %v711, 0
    %732 = vmatprep.subr.bf16.mxu0 0
    %733 = vmatpush1.bf16.msra.mxu0 0
    %734 = vmatprep.subr.bf16.mxu0 0
    %735 = vmatpush1.bf16.msra.mxu0 0
    %736 = vmatprep.subr.bf16.mxu0 0
    %737 = vmatpush1.bf16.msra.mxu0 0
    %738 = vmatprep.subr.bf16.mxu0 0
    %739 = vmatpush1.bf16.msra.mxu0 0
    %740 = vmatprep.subr.bf16.mxu0 0
    %741 = vmatpush1.bf16.msra.mxu0 0
    %742 = vmatprep.subr.bf16.mxu0 0
    %743 = vmatpush1.bf16.msra.mxu0 0
    %744 = vmatprep.subr.bf16.mxu0 0
    %745 = vmatpush1.bf16.msra.mxu0 %v726
    %746 = vmatprep.subr.bf16.mxu0 0
    %747 = vmatpush1.bf16.msra.mxu0 %v725
    %748 = vmatprep.subr.bf16.mxu0 0
    %749 = vmatpush2.bf16.msra.mxu0 0
    %750 = vmatprep.subr.bf16.mxu0 0
    %751 = vmatpush2.bf16.msra.mxu0 0
    %752 = vmatprep.subr.bf16.mxu0 0
    %753 = vmatpush2.bf16.msra.mxu0 0
    %754 = vmatprep.subr.bf16.mxu0 0
    %755 = vmatpush2.bf16.msra.mxu0 0
    %756 = vmatprep.subr.bf16.mxu0 0
    %757 = vmatpush2.bf16.msra.mxu0 0
    %758 = vmatprep.subr.bf16.mxu0 0
    %759 = vmatpush2.bf16.msra.mxu0 0
    %760 = vmatprep.subr.bf16.mxu0 0
    %761 = vmatpush2.bf16.msra.mxu0 0
    %762 = vmatprep.subr.bf16.mxu0 0
    %763 = vmatpush2.bf16.msra.mxu0 0
    %764 = vmatprep.mubr.bf16.mxu0 0
    %765 = vmatmul.mubr.bf16.gmra.mxu0 %v730
    %v766 = vpop.f32.mrf.mxu0
    %v767 = vadd.f32 %v716, %v766
    %v768 = vpop.f32.mrf.mxu0
    %v769 = vpop.f32.mrf.mxu0
    %v770 = vadd.f32 %v716, %v769
    %v771 = vpop.f32.mrf.mxu0
    %772 = vdwg.mxu0
    %v773 = vpack.c.bf16 %v770, %v767
    %775 = vrot.lane.b32.xlu0 %v773, 96
    %v776 = vpop.permute.xlu0 %775
    %v778 = vsel %vm148, %v773, 0
    %v781 = vsel %vm148, %v776, 0
    %783 = vmatprep.subr.bf16.mxu0 0
    %784 = vmatpush1.bf16.xpose.msra.mxu0 0
    %785 = vmatprep.subr.bf16.mxu0 0
    %786 = vmatpush1.bf16.xpose.msra.mxu0 0
    %787 = vmatprep.subr.bf16.mxu0 0
    %788 = vmatpush1.bf16.xpose.msra.mxu0 0
    %789 = vmatprep.subr.bf16.mxu0 0
    %790 = vmatpush1.bf16.xpose.msra.mxu0 0
    %791 = vmatprep.subr.bf16.mxu0 0
    %792 = vmatpush1.bf16.xpose.msra.mxu0 0
    %793 = vmatprep.subr.bf16.mxu0 0
    %794 = vmatpush1.bf16.xpose.msra.mxu0 0
    %795 = vmatprep.subr.bf16.mxu0 0
    %796 = vmatpush1.bf16.xpose.msra.mxu0 0
    %797 = vmatprep.subr.bf16.mxu0 0
    %798 = vmatpush1.bf16.xpose.msra.mxu0 %v781
    %799 = vmatprep.subr.bf16.mxu0 0
    %800 = vmatpush2.bf16.xpose.msra.mxu0 0
    %801 = vmatprep.subr.bf16.mxu0 0
    %802 = vmatpush2.bf16.xpose.msra.mxu0 0
    %803 = vmatprep.subr.bf16.mxu0 0
    %804 = vmatpush2.bf16.xpose.msra.mxu0 0
    %805 = vmatprep.subr.bf16.mxu0 0
    %806 = vmatpush2.bf16.xpose.msra.mxu0 0
    %807 = vmatprep.subr.bf16.mxu0 0
    %808 = vmatpush2.bf16.xpose.msra.mxu0 0
    %809 = vmatprep.subr.bf16.mxu0 0
    %810 = vmatpush2.bf16.xpose.msra.mxu0 0
    %811 = vmatprep.subr.bf16.mxu0 0
    %812 = vmatpush2.bf16.xpose.msra.mxu0 0
    %813 = vmatprep.subr.bf16.mxu0 0
    %814 = vmatpush2.bf16.xpose.msra.mxu0 0
    %815 = vmatprep.mubr.bf16.mxu0 0
    %816 = vmatmul.mubr.bf16.gmra.mxu0 %v778
    %v817 = vpop.f32.mrf.mxu0
    %v818 = vadd.f32 %v32, %v817
    %v819 = vpop.f32.mrf.mxu0
    %v820 = vpop.f32.mrf.mxu0
    %v821 = vadd.f32 %v33, %v820
    %v822 = vpop.f32.mrf.mxu0
    %823 = vdwg.mxu0
    %v824 = vsel %vm148, %v818, -inf
    %825 = vmax.xlane.f32.xlu0 %v824
    %v826 = vpop.xlane.xlu0 %825
    %v827 = vsel %vm148, %v821, -inf
    %828 = vmax.xlane.f32.xlu0 %v827
    %v829 = vpop.xlane.xlu0 %828
    %v830 = vsub.f32 %v818, %v826
    %v831 = vsub.f32 %v821, %v829
    %v832 = vmul.f32 %v830, 1.442695
    %v833 = vpow.pop %v832
    %v834 = vmul.f32 %v831, 1.442695
    %v835 = vpow.pop %v834
    %v836 = vsel %vm148, %v833, 0.0
    %837 = vadd.xlane.f32.xlu0 %v836
    %v838 = vpop.xlane.xlu0 %837
    %v839 = vsel %vm148, %v835, 0.0
    %840 = vadd.xlane.f32.xlu0 %v839
    %v841 = vpop.xlane.xlu0 %840
    %v842 = vrcp.pop %v838
    %v843 = vrcp.pop %v841
    %v844 = vmul.f32 %v833, %v842
    %v845 = vmul.f32 %v835, %v843
    %v846 = vpack.c.bf16 %v845, %v844
    %847 = vrot.lane.b32.xlu0 %v773, 64
    %v848 = vpop.permute.xlu0 %847
    %v851 = vsel %vm148, %v846, 0
    %853 = vmatprep.subr.bf16.mxu0 0
    %854 = vmatpush1.bf16.msra.mxu0 0
    %855 = vmatprep.subr.bf16.mxu0 0
    %856 = vmatpush1.bf16.msra.mxu0 0
    %857 = vmatprep.subr.bf16.mxu0 0
    %858 = vmatpush1.bf16.msra.mxu0 0
    %859 = vmatprep.subr.bf16.mxu0 0
    %860 = vmatpush1.bf16.msra.mxu0 0
    %861 = vmatprep.subr.bf16.mxu0 0
    %862 = vmatpush1.bf16.msra.mxu0 0
    %863 = vmatprep.subr.bf16.mxu0 0
    %864 = vmatpush1.bf16.msra.mxu0 0
    %865 = vmatprep.subr.bf16.mxu0 0
    %866 = vmatpush1.bf16.msra.mxu0 0
    %867 = vmatprep.subr.bf16.mxu0 0
    %868 = vmatpush1.bf16.msra.mxu0 %v848
    %869 = vmatprep.subr.bf16.mxu0 0
    %870 = vmatpush2.bf16.msra.mxu0 0
    %871 = vmatprep.subr.bf16.mxu0 0
    %872 = vmatpush2.bf16.msra.mxu0 0
    %873 = vmatprep.subr.bf16.mxu0 0
    %874 = vmatpush2.bf16.msra.mxu0 0
    %875 = vmatprep.subr.bf16.mxu0 0
    %876 = vmatpush2.bf16.msra.mxu0 0
    %877 = vmatprep.subr.bf16.mxu0 0
    %878 = vmatpush2.bf16.msra.mxu0 0
    %879 = vmatprep.subr.bf16.mxu0 0
    %880 = vmatpush2.bf16.msra.mxu0 0
    %881 = vmatprep.subr.bf16.mxu0 0
    %882 = vmatpush2.bf16.msra.mxu0 0
    %883 = vmatprep.subr.bf16.mxu0 0
    %884 = vmatpush2.bf16.msra.mxu0 0
    %885 = vmatprep.mubr.bf16.mxu0 0
    %886 = vmatmul.mubr.bf16.gmra.mxu0 %v851
    %v887 = vpop.f32.mrf.mxu0
    %v888 = vadd.f32 0.0, %v887
    %v889 = vpop.f32.mrf.mxu0
    %v890 = vpop.f32.mrf.mxu0
    %v891 = vadd.f32 0.0, %v890
    %v892 = vpop.f32.mrf.mxu0
    %893 = vdwg.mxu0
    %894 = vrot.lane.b32.xlu0 %v773, 112
    %v895 = vpop.permute.xlu0 %894
    %896 = vrot.lane.b32.xlu0 %v773, 80
    %v897 = vpop.permute.xlu0 %896
    %v899 = vsel %vm148, %v895, 0
    %v902 = vsel %vm148, %v897, 0
    %904 = vmatprep.subr.bf16.mxu0 0
    %905 = vmatpush1.bf16.xpose.msra.mxu0 0
    %906 = vmatprep.subr.bf16.mxu0 0
    %907 = vmatpush1.bf16.xpose.msra.mxu0 0
    %908 = vmatprep.subr.bf16.mxu0 0
    %909 = vmatpush1.bf16.xpose.msra.mxu0 0
    %910 = vmatprep.subr.bf16.mxu0 0
    %911 = vmatpush1.bf16.xpose.msra.mxu0 0
    %912 = vmatprep.subr.bf16.mxu0 0
    %913 = vmatpush1.bf16.xpose.msra.mxu0 0
    %914 = vmatprep.subr.bf16.mxu0 0
    %915 = vmatpush1.bf16.xpose.msra.mxu0 0
    %916 = vmatprep.subr.bf16.mxu0 0
    %917 = vmatpush1.bf16.xpose.msra.mxu0 0
    %918 = vmatprep.subr.bf16.mxu0 0
    %919 = vmatpush1.bf16.xpose.msra.mxu0 %v902
    %920 = vmatprep.subr.bf16.mxu0 0
    %921 = vmatpush2.bf16.xpose.msra.mxu0 0
    %922 = vmatprep.subr.bf16.mxu0 0
    %923 = vmatpush2.bf16.xpose.msra.mxu0 0
    %924 = vmatprep.subr.bf16.mxu0 0
    %925 = vmatpush2.bf16.xpose.msra.mxu0 0
    %926 = vmatprep.subr.bf16.mxu0 0
    %927 = vmatpush2.bf16.xpose.msra.mxu0 0
    %928 = vmatprep.subr.bf16.mxu0 0
    %929 = vmatpush2.bf16.xpose.msra.mxu0 0
    %930 = vmatprep.subr.bf16.mxu0 0
    %931 = vmatpush2.bf16.xpose.msra.mxu0 0
    %932 = vmatprep.subr.bf16.mxu0 0
    %933 = vmatpush2.bf16.xpose.msra.mxu0 0
    %934 = vmatprep.subr.bf16.mxu0 0
    %935 = vmatpush2.bf16.xpose.msra.mxu0 0
    %936 = vmatprep.mubr.bf16.mxu0 0
    %937 = vmatmul.mubr.bf16.gmra.mxu0 %v899
    %v938 = vpop.f32.mrf.mxu0
    %v939 = vadd.f32 %v32, %v938
    %v940 = vpop.f32.mrf.mxu0
    %v941 = vpop.f32.mrf.mxu0
    %v942 = vadd.f32 %v33, %v941
    %v943 = vpop.f32.mrf.mxu0
    %944 = vdwg.mxu0
    %v945 = vsel %vm148, %v939, -inf
    %946 = vmax.xlane.f32.xlu0 %v945
    %v947 = vpop.xlane.xlu0 %946
    %v948 = vsel %vm148, %v942, -inf
    %949 = vmax.xlane.f32.xlu0 %v948
    %v950 = vpop.xlane.xlu0 %949
    %v951 = vsub.f32 %v939, %v947
    %v952 = vsub.f32 %v942, %v950
    %v953 = vmul.f32 %v951, 1.442695
    %v954 = vpow.pop %v953
    %v955 = vmul.f32 %v952, 1.442695
    %v956 = vpow.pop %v955
    %v957 = vsel %vm148, %v954, 0.0
    %958 = vadd.xlane.f32.xlu0 %v957
    %v959 = vpop.xlane.xlu0 %958
    %v960 = vsel %vm148, %v956, 0.0
    %961 = vadd.xlane.f32.xlu0 %v960
    %v962 = vpop.xlane.xlu0 %961
    %v963 = vrcp.pop %v959
    %v964 = vrcp.pop %v962
    %v965 = vmul.f32 %v954, %v963
    %v966 = vmul.f32 %v956, %v964
    %v967 = vpack.c.bf16 %v966, %v965
    %968 = vrot.lane.b32.xlu0 %v773, 48
    %v969 = vpop.permute.xlu0 %968
    %v972 = vsel %vm148, %v967, 0
    %974 = vmatprep.subr.bf16.mxu0 0
    %975 = vmatpush1.bf16.msra.mxu0 0
    %976 = vmatprep.subr.bf16.mxu0 0
    %977 = vmatpush1.bf16.msra.mxu0 0
    %978 = vmatprep.subr.bf16.mxu0 0
    %979 = vmatpush1.bf16.msra.mxu0 0
    %980 = vmatprep.subr.bf16.mxu0 0
    %981 = vmatpush1.bf16.msra.mxu0 0
    %982 = vmatprep.subr.bf16.mxu0 0
    %983 = vmatpush1.bf16.msra.mxu0 0
    %984 = vmatprep.subr.bf16.mxu0 0
    %985 = vmatpush1.bf16.msra.mxu0 0
    %986 = vmatprep.subr.bf16.mxu0 0
    %987 = vmatpush1.bf16.msra.mxu0 0
    %988 = vmatprep.subr.bf16.mxu0 0
    %989 = vmatpush1.bf16.msra.mxu0 %v969
    %990 = vmatprep.subr.bf16.mxu0 0
    %991 = vmatpush2.bf16.msra.mxu0 0
    %992 = vmatprep.subr.bf16.mxu0 0
    %993 = vmatpush2.bf16.msra.mxu0 0
    %994 = vmatprep.subr.bf16.mxu0 0
    %995 = vmatpush2.bf16.msra.mxu0 0
    %996 = vmatprep.subr.bf16.mxu0 0
    %997 = vmatpush2.bf16.msra.mxu0 0
    %998 = vmatprep.subr.bf16.mxu0 0
    %999 = vmatpush2.bf16.msra.mxu0 0
    %1000 = vmatprep.subr.bf16.mxu0 0
    %1001 = vmatpush2.bf16.msra.mxu0 0
    %1002 = vmatprep.subr.bf16.mxu0 0
    %1003 = vmatpush2.bf16.msra.mxu0 0
    %1004 = vmatprep.subr.bf16.mxu0 0
    %1005 = vmatpush2.bf16.msra.mxu0 0
    %1006 = vmatprep.mubr.bf16.mxu0 0
    %1007 = vmatmul.mubr.bf16.gmra.mxu0 %v972
    %v1008 = vpop.f32.mrf.mxu0
    %v1009 = vadd.f32 0.0, %v1008
    %v1010 = vpop.f32.mrf.mxu0
    %v1011 = vpop.f32.mrf.mxu0
    %v1012 = vadd.f32 0.0, %v1011
    %v1013 = vpop.f32.mrf.mxu0
    %1014 = vdwg.mxu0
    %1017 = vrot.lane.b32.xlu0 %v1009, 16
    %v1018 = vpop.permute.xlu0 %1017
    %1019 = vrot.lane.b32.xlu0 %v1012, 16
    %v1020 = vpop.permute.xlu0 %1019
    %v1023 = vsel %vm148, %v888, %v1018
    %v1024 = vsel %vm148, %v891, %v1020
    %v1025 = vld [vmem:[%s2 + $0x60] sm:$0xf]
    %v1026 = vld [vmem:[%s2 + $0x64] sm:$0xf]
    %v1027 = vld [vmem:[%s2 + $0x68] sm:$0xf]
    %v1028 = vld [vmem:[%s2 + $0x6c] sm:$0xf]
    %v1029 = vpack.c.bf16 %v1024, %v1023
    %v1030 = vld [vmem:[%s1 + $0xb] sm:$0x1]
    %v1031 = vlaneseq
    %v1032 = vshrl.u32 %v1031, 7
    %v1033 = vsub.s32 0, %v1032
    %v1034 = vrot.slane %v1030, %v1033
    %v1039 = vunpack.c.l.b16 %v1025
    %v1040 = vunpack.c.l.b16 %v1026
    %v1041 = vunpack.c.l.b16 %v1027
    %v1042 = vunpack.c.l.b16 %v1028
    %v1043 = vpack.c.b16 %v1040, %v1039
    %v1044 = vpack.c.b16 %v1042, %v1041
    %v1048 = vsel %vm38, %v1029, 0
    %1050 = vmatprep.subr.bf16.mxu0 0
    %1051 = vmatpush1.bf16.msra.mxu0 0
    %1052 = vmatprep.subr.bf16.mxu0 0
    %1053 = vmatpush1.bf16.msra.mxu0 0
    %1054 = vmatprep.subr.bf16.mxu0 0
    %1055 = vmatpush1.bf16.msra.mxu0 0
    %1056 = vmatprep.subr.bf16.mxu0 0
    %1057 = vmatpush1.bf16.msra.mxu0 0
    %1058 = vmatprep.subr.bf16.mxu0 0
    %1059 = vmatpush1.bf16.msra.mxu0 0
    %1060 = vmatprep.subr.bf16.mxu0 0
    %1061 = vmatpush1.bf16.msra.mxu0 0
    %1062 = vmatprep.subr.bf16.mxu0 0
    %1063 = vmatpush1.bf16.msra.mxu0 %v1044
    %1064 = vmatprep.subr.bf16.mxu0 0
    %1065 = vmatpush1.bf16.msra.mxu0 %v1043
    %1066 = vmatprep.subr.bf16.mxu0 0
    %1067 = vmatpush2.bf16.msra.mxu0 0
    %1068 = vmatprep.subr.bf16.mxu0 0
    %1069 = vmatpush2.bf16.msra.mxu0 0
    %1070 = vmatprep.subr.bf16.mxu0 0
    %1071 = vmatpush2.bf16.msra.mxu0 0
    %1072 = vmatprep.subr.bf16.mxu0 0
    %1073 = vmatpush2.bf16.msra.mxu0 0
    %1074 = vmatprep.subr.bf16.mxu0 0
    %1075 = vmatpush2.bf16.msra.mxu0 0
    %1076 = vmatprep.subr.bf16.mxu0 0
    %1077 = vmatpush2.bf16.msra.mxu0 0
    %1078 = vmatprep.subr.bf16.mxu0 0
    %1079 = vmatpush2.bf16.msra.mxu0 0
    %1080 = vmatprep.subr.bf16.mxu0 0
    %1081 = vmatpush2.bf16.msra.mxu0 0
    %1082 = vmatprep.mubr.bf16.mxu0 0
    %1083 = vmatmul.mubr.bf16.gmra.mxu0 %v1048
    %v1084 = vpop.f32.mrf.mxu0
    %v1085 = vadd.f32 %v1034, %v1084
    %v1086 = vpop.f32.mrf.mxu0
    %v1087 = vpop.f32.mrf.mxu0
    %v1088 = vadd.f32 %v1034, %v1087
    %v1089 = vpop.f32.mrf.mxu0
    %1090 = vdwg.mxu0
    %v1091 = vadd.f32 %v705, %v1085
    %v1092 = vadd.f32 %v706, %v1088
    %v1093 = vld [vmem:[%s1 + $0xc] sm:$0x1]
    %v1094 = vld [vmem:[%s1 + $0xd] sm:$0x1]
    %v1095 = vsel %vm38, %v1091, 0.0
    %1096 = vadd.xlane.f32.xlu0 %v1095
    %v1097 = vpop.xlane.xlu0 %1096
    %v1098 = vsel %vm38, %v1092, 0.0
    %1099 = vadd.xlane.f32.xlu0 %v1098
    %v1100 = vpop.xlane.xlu0 %1099
    %v1101 = vmul.f32 %v1097, %v45
    %v1102 = vmul.f32 %v1100, %v45
    %v1103 = vsub.f32 %v1091, %v1101
    %v1104 = vsub.f32 %v1092, %v1102
    %v1105 = vmul.f32 %v1103, %v1103
    %v1106 = vmul.f32 %v1104, %v1104
    %v1107 = vsel %vm38, %v1105, 0.0
    %1108 = vadd.xlane.f32.xlu0 %v1107
    %v1109 = vpop.xlane.xlu0 %1108
    %v1110 = vsel %vm38, %v1106, 0.0
    %1111 = vadd.xlane.f32.xlu0 %v1110
    %v1112 = vpop.xlane.xlu0 %1111
    %v1113 = vmul.f32 %v1109, %v45
    %v1114 = vmul.f32 %v1112, %v45
    %v1115 = vadd.f32 %v1113, 1e-12
    %v1116 = vadd.f32 %v1114, 1e-12
    %v1117 = vrsqrt.pop %v1115
    %v1118 = vrsqrt.pop %v1116
    %v1119 = vmul.f32 %v1103, %v1117
    %v1120 = vmul.f32 %v1104, %v1118
    %v1121 = vlaneseq
    %v1122 = vshrl.u32 %v1121, 7
    %v1123 = vsub.s32 0, %v1122
    %v1124 = vrot.slane %v1093, %v1123
    %v1125 = vmul.f32 %v1119, %v1124
    %v1126 = vmul.f32 %v1120, %v1124
    %v1127 = vlaneseq
    %v1128 = vshrl.u32 %v1127, 7
    %v1129 = vsub.s32 0, %v1128
    %v1130 = vrot.slane %v1094, %v1129
    %v1131 = vadd.f32 %v1125, %v1130
    %v1132 = vadd.f32 %v1126, %v1130
    %v1133 = vld [vmem:[%s2 + $0x70] sm:$0xf]
    %v1134 = vld [vmem:[%s2 + $0x74] sm:$0xf]
    %v1135 = vld [vmem:[%s2 + $0x78] sm:$0xf]
    %v1136 = vld [vmem:[%s2 + $0x7c] sm:$0xf]
    %v1137 = vpack.c.bf16 %v1132, %v1131
    %v1138 = vld [vmem:[%s1 + $0xe] sm:$0x1]
    %v1139 = vlaneseq
    %v1140 = vshrl.u32 %v1139, 7
    %v1141 = vsub.s32 0, %v1140
    %v1142 = vrot.slane %v1138, %v1141
    %v1147 = vunpack.c.l.b16 %v1133
    %v1148 = vunpack.c.l.b16 %v1134
    %v1149 = vunpack.c.l.b16 %v1135
    %v1150 = vunpack.c.l.b16 %v1136
    %v1151 = vpack.c.b16 %v1148, %v1147
    %v1152 = vpack.c.b16 %v1150, %v1149
    %v1156 = vsel %vm38, %v1137, 0
    %1158 = vmatprep.subr.bf16.mxu0 0
    %1159 = vmatpush1.bf16.msra.mxu0 0
    %1160 = vmatprep.subr.bf16.mxu0 0
    %1161 = vmatpush1.bf16.msra.mxu0 0
    %1162 = vmatprep.subr.bf16.mxu0 0
    %1163 = vmatpush1.bf16.msra.mxu0 0
    %1164 = vmatprep.subr.bf16.mxu0 0
    %1165 = vmatpush1.bf16.msra.mxu0 0
    %1166 = vmatprep.subr.bf16.mxu0 0
    %1167 = vmatpush1.bf16.msra.mxu0 0
    %1168 = vmatprep.subr.bf16.mxu0 0
    %1169 = vmatpush1.bf16.msra.mxu0 0
    %1170 = vmatprep.subr.bf16.mxu0 0
    %1171 = vmatpush1.bf16.msra.mxu0 %v1152
    %1172 = vmatprep.subr.bf16.mxu0 0
    %1173 = vmatpush1.bf16.msra.mxu0 %v1151
    %1174 = vmatprep.subr.bf16.mxu0 0
    %1175 = vmatpush2.bf16.msra.mxu0 0
    %1176 = vmatprep.subr.bf16.mxu0 0
    %1177 = vmatpush2.bf16.msra.mxu0 0
    %1178 = vmatprep.subr.bf16.mxu0 0
    %1179 = vmatpush2.bf16.msra.mxu0 0
    %1180 = vmatprep.subr.bf16.mxu0 0
    %1181 = vmatpush2.bf16.msra.mxu0 0
    %1182 = vmatprep.subr.bf16.mxu0 0
    %1183 = vmatpush2.bf16.msra.mxu0 0
    %1184 = vmatprep.subr.bf16.mxu0 0
    %1185 = vmatpush2.bf16.msra.mxu0 0
    %1186 = vmatprep.subr.bf16.mxu0 0
    %1187 = vmatpush2.bf16.msra.mxu0 0
    %1188 = vmatprep.subr.bf16.mxu0 0
    %1189 = vmatpush2.bf16.msra.mxu0 0
    %1190 = vmatprep.mubr.bf16.mxu0 0
    %1191 = vmatmul.mubr.bf16.gmra.mxu0 %v1156
    %v1192 = vpop.f32.mrf.mxu0
    %v1193 = vadd.f32 %v1142, %v1192
    %v1194 = vpop.f32.mrf.mxu0
    %v1195 = vpop.f32.mrf.mxu0
    %v1196 = vadd.f32 %v1142, %v1195
    %v1197 = vpop.f32.mrf.mxu0
    %1198 = vdwg.mxu0
    %v1199 = vmul.f32 %v1193, 0.5
    %v1200 = vmul.f32 %v1196, 0.5
    %v1201 = vmul.f32 %v1193, %v573
    %v1202 = vmul.f32 %v1196, %v573
    %v1203 = verf.f32.pop %v1201
    %v1204 = verf.f32.pop %v1202
    %v1205 = vadd.f32 %v1203, 1.0
    %v1206 = vadd.f32 %v1204, 1.0
    %v1207 = vmul.f32 %v1199, %v1205
    %v1208 = vmul.f32 %v1200, %v1206
    %v1209 = vld [vmem:[%s2 + $0x80] sm:$0xf]
    %v1210 = vld [vmem:[%s2 + $0x84] sm:$0xf]
    %v1211 = vld [vmem:[%s2 + $0x88] sm:$0xf]
    %v1212 = vld [vmem:[%s2 + $0x8c] sm:$0xf]
    %v1213 = vld [vmem:[%s2 + $0x90] sm:$0xf]
    %v1214 = vld [vmem:[%s2 + $0x94] sm:$0xf]
    %v1215 = vld [vmem:[%s2 + $0x98] sm:$0xf]
    %v1216 = vld [vmem:[%s2 + $0x9c] sm:$0xf]
    %v1217 = vpack.c.bf16 %v1208, %v1207
    %v1218 = vld [vmem:[%s1 + $0xf] sm:$0x1]
    %v1219 = vlaneseq
    %v1220 = vshrl.u32 %v1219, 7
    %v1221 = vsub.s32 0, %v1220
    %v1222 = vrot.slane %v1218, %v1221
    %v1231 = vunpack.c.l.b16 %v1209
    %v1232 = vunpack.c.l.b16 %v1210
    %v1233 = vunpack.c.l.b16 %v1211
    %v1234 = vunpack.c.l.b16 %v1212
    %v1235 = vunpack.c.l.b16 %v1213
    %v1236 = vunpack.c.l.b16 %v1214
    %v1237 = vunpack.c.l.b16 %v1215
    %v1238 = vunpack.c.l.b16 %v1216
    %v1239 = vpack.c.b16 %v1232, %v1231
    %v1240 = vpack.c.b16 %v1234, %v1233
    %v1241 = vpack.c.b16 %v1236, %v1235
    %v1242 = vpack.c.b16 %v1238, %v1237
    %v1248 = vsel %vm620, %v1217, 0
    %1250 = vmatprep.subr.bf16.mxu0 0
    %1251 = vmatpush1.bf16.msra.mxu0 0
    %1252 = vmatprep.subr.bf16.mxu0 0
    %1253 = vmatpush1.bf16.msra.mxu0 0
    %1254 = vmatprep.subr.bf16.mxu0 0
    %1255 = vmatpush1.bf16.msra.mxu0 0
    %1256 = vmatprep.subr.bf16.mxu0 0
    %1257 = vmatpush1.bf16.msra.mxu0 0
    %1258 = vmatprep.subr.bf16.mxu0 0
    %1259 = vmatpush1.bf16.msra.mxu0 %v1242
    %1260 = vmatprep.subr.bf16.mxu0 0
    %1261 = vmatpush1.bf16.msra.mxu0 %v1241
    %1262 = vmatprep.subr.bf16.mxu0 0
    %1263 = vmatpush1.bf16.msra.mxu0 %v1240
    %1264 = vmatprep.subr.bf16.mxu0 0
    %1265 = vmatpush1.bf16.msra.mxu0 %v1239
    %1266 = vmatprep.subr.bf16.mxu0 0
    %1267 = vmatpush2.bf16.msra.mxu0 0
    %1268 = vmatprep.subr.bf16.mxu0 0
    %1269 = vmatpush2.bf16.msra.mxu0 0
    %1270 = vmatprep.subr.bf16.mxu0 0
    %1271 = vmatpush2.bf16.msra.mxu0 0
    %1272 = vmatprep.subr.bf16.mxu0 0
    %1273 = vmatpush2.bf16.msra.mxu0 0
    %1274 = vmatprep.subr.bf16.mxu0 0
    %1275 = vmatpush2.bf16.msra.mxu0 0
    %1276 = vmatprep.subr.bf16.mxu0 0
    %1277 = vmatpush2.bf16.msra.mxu0 0
    %1278 = vmatprep.subr.bf16.mxu0 0
    %1279 = vmatpush2.bf16.msra.mxu0 0
    %1280 = vmatprep.subr.bf16.mxu0 0
    %1281 = vmatpush2.bf16.msra.mxu0 0
    %1282 = vmatprep.mubr.bf16.mxu0 0
    %1283 = vmatmul.mubr.bf16.gmra.mxu0 %v1248
    %v1284 = vpop.f32.mrf.mxu0
    %v1285 = vadd.f32 %v1222, %v1284
    %v1286 = vpop.f32.mrf.mxu0
    %v1287 = vpop.f32.mrf.mxu0
    %v1288 = vadd.f32 %v1222, %v1287
    %v1289 = vpop.f32.mrf.mxu0
    %1290 = vdwg.mxu0
    %v1291 = vadd.f32 %v1131, %v1285
    %v1292 = vadd.f32 %v1132, %v1288
    %v1293 = vld [vmem:[%s1 + $0x10] sm:$0x1]
    %v1294 = vld [vmem:[%s1 + $0x11] sm:$0x1]
    %v1295 = vsel %vm38, %v1291, 0.0
    %1296 = vadd.xlane.f32.xlu0 %v1295
    %v1297 = vpop.xlane.xlu0 %1296
    %v1298 = vsel %vm38, %v1292, 0.0
    %1299 = vadd.xlane.f32.xlu0 %v1298
    %v1300 = vpop.xlane.xlu0 %1299
    %v1301 = vmul.f32 %v1297, %v45
    %v1302 = vmul.f32 %v1300, %v45
    %v1303 = vsub.f32 %v1291, %v1301
    %v1304 = vsub.f32 %v1292, %v1302
    %v1305 = vmul.f32 %v1303, %v1303
    %v1306 = vmul.f32 %v1304, %v1304
    %v1307 = vsel %vm38, %v1305, 0.0
    %1308 = vadd.xlane.f32.xlu0 %v1307
    %v1309 = vpop.xlane.xlu0 %1308
    %v1310 = vsel %vm38, %v1306, 0.0
    %1311 = vadd.xlane.f32.xlu0 %v1310
    %v1312 = vpop.xlane.xlu0 %1311
    %v1313 = vmul.f32 %v1309, %v45
    %v1314 = vmul.f32 %v1312, %v45
    %v1315 = vadd.f32 %v1313, 1e-12
    %v1316 = vadd.f32 %v1314, 1e-12
    %v1317 = vrsqrt.pop %v1315
    %v1318 = vrsqrt.pop %v1316
    %v1319 = vmul.f32 %v1303, %v1317
    %v1320 = vmul.f32 %v1304, %v1318
    %v1321 = vlaneseq
    %v1322 = vshrl.u32 %v1321, 7
    %v1323 = vsub.s32 0, %v1322
    %v1324 = vrot.slane %v1293, %v1323
    %v1325 = vmul.f32 %v1319, %v1324
    %v1326 = vmul.f32 %v1320, %v1324
    %v1327 = vlaneseq
    %v1328 = vshrl.u32 %v1327, 7
    %v1329 = vsub.s32 0, %v1328
    %v1330 = vrot.slane %v1294, %v1329
    %v1331 = vadd.f32 %v1325, %v1330
    %v1332 = vadd.f32 %v1326, %v1330
    %v1333 = vld [vmem:[%s2 + $0xa0] sm:$0xf]
    %v1334 = vld [vmem:[%s2 + $0xa4] sm:$0xf]
    %v1335 = vld [vmem:[%s2 + $0xa8] sm:$0xf]
    %v1336 = vld [vmem:[%s2 + $0xac] sm:$0xf]
    %v1337 = vpack.c.bf16 %v1332, %v1331
    %v1338 = vld [vmem:[%s1 + $0x12] sm:$0x1]
    %v1339 = vlaneseq
    %v1340 = vshrl.u32 %v1339, 7
    %v1341 = vsub.s32 0, %v1340
    %v1342 = vrot.slane %v1338, %v1341
    %v1347 = vunpack.c.l.b16 %v1333
    %v1348 = vunpack.c.l.b16 %v1334
    %v1349 = vunpack.c.l.b16 %v1335
    %v1350 = vunpack.c.l.b16 %v1336
    %v1351 = vpack.c.b16 %v1348, %v1347
    %v1352 = vpack.c.b16 %v1350, %v1349
    %v1356 = vsel %vm38, %v1337, 0
    %1358 = vmatprep.subr.bf16.mxu0 0
    %1359 = vmatpush1.bf16.msra.mxu0 0
    %1360 = vmatprep.subr.bf16.mxu0 0
    %1361 = vmatpush1.bf16.msra.mxu0 0
    %1362 = vmatprep.subr.bf16.mxu0 0
    %1363 = vmatpush1.bf16.msra.mxu0 0
    %1364 = vmatprep.subr.bf16.mxu0 0
    %1365 = vmatpush1.bf16.msra.mxu0 0
    %1366 = vmatprep.subr.bf16.mxu0 0
    %1367 = vmatpush1.bf16.msra.mxu0 0
    %1368 = vmatprep.subr.bf16.mxu0 0
    %1369 = vmatpush1.bf16.msra.mxu0 0
    %1370 = vmatprep.subr.bf16.mxu0 0
    %1371 = vmatpush1.bf16.msra.mxu0 %v1352
    %1372 = vmatprep.subr.bf16.mxu0 0
    %1373 = vmatpush1.bf16.msra.mxu0 %v1351
    %1374 = vmatprep.subr.bf16.mxu0 0
    %1375 = vmatpush2.bf16.msra.mxu0 0
    %1376 = vmatprep.subr.bf16.mxu0 0
    %1377 = vmatpush2.bf16.msra.mxu0 0
    %1378 = vmatprep.subr.bf16.mxu0 0
    %1379 = vmatpush2.bf16.msra.mxu0 0
    %1380 = vmatprep.subr.bf16.mxu0 0
    %1381 = vmatpush2.bf16.msra.mxu0 0
    %1382 = vmatprep.subr.bf16.mxu0 0
    %1383 = vmatpush2.bf16.msra.mxu0 0
    %1384 = vmatprep.subr.bf16.mxu0 0
    %1385 = vmatpush2.bf16.msra.mxu0 0
    %1386 = vmatprep.subr.bf16.mxu0 0
    %1387 = vmatpush2.bf16.msra.mxu0 0
    %1388 = vmatprep.subr.bf16.mxu0 0
    %1389 = vmatpush2.bf16.msra.mxu0 0
    %1390 = vmatprep.mubr.bf16.mxu0 0
    %1391 = vmatmul.mubr.bf16.gmra.mxu0 %v1356
    %v1392 = vpop.f32.mrf.mxu0
    %v1393 = vadd.f32 %v1342, %v1392
    %v1394 = vpop.f32.mrf.mxu0
    %v1395 = vpop.f32.mrf.mxu0
    %v1396 = vadd.f32 %v1342, %v1395
    %v1397 = vpop.f32.mrf.mxu0
    %1398 = vdwg.mxu0
    %v1399 = vmul.f32 %v1393, 0.5
    %v1400 = vmul.f32 %v1396, 0.5
    %v1401 = vmul.f32 %v1393, %v573
    %v1402 = vmul.f32 %v1396, %v573
    %v1403 = verf.f32.pop %v1401
    %v1404 = verf.f32.pop %v1402
    %v1405 = vadd.f32 %v1403, 1.0
    %v1406 = vadd.f32 %v1404, 1.0
    %v1407 = vmul.f32 %v1399, %v1405
    %v1408 = vmul.f32 %v1400, %v1406
    %v1409 = vld [vmem:[%s1 + $0x13] sm:$0x1]
    %v1410 = vld [vmem:[%s1 + $0x14] sm:$0x1]
    %v1411 = vsel %vm38, %v1407, 0.0
    %1412 = vadd.xlane.f32.xlu0 %v1411
    %v1413 = vpop.xlane.xlu0 %1412
    %v1414 = vsel %vm38, %v1408, 0.0
    %1415 = vadd.xlane.f32.xlu0 %v1414
    %v1416 = vpop.xlane.xlu0 %1415
    %v1417 = vmul.f32 %v1413, %v45
    %v1418 = vmul.f32 %v1416, %v45
    %v1419 = vsub.f32 %v1407, %v1417
    %v1420 = vsub.f32 %v1408, %v1418
    %v1421 = vmul.f32 %v1419, %v1419
    %v1422 = vmul.f32 %v1420, %v1420
    %v1423 = vsel %vm38, %v1421, 0.0
    %1424 = vadd.xlane.f32.xlu0 %v1423
    %v1425 = vpop.xlane.xlu0 %1424
    %v1426 = vsel %vm38, %v1422, 0.0
    %1427 = vadd.xlane.f32.xlu0 %v1426
    %v1428 = vpop.xlane.xlu0 %1427
    %v1429 = vmul.f32 %v1425, %v45
    %v1430 = vmul.f32 %v1428, %v45
    %v1431 = vadd.f32 %v1429, 1e-12
    %v1432 = vadd.f32 %v1430, 1e-12
    %v1433 = vrsqrt.pop %v1431
    %v1434 = vrsqrt.pop %v1432
    %v1435 = vmul.f32 %v1419, %v1433
    %v1436 = vmul.f32 %v1420, %v1434
    %v1437 = vlaneseq
    %v1438 = vshrl.u32 %v1437, 7
    %v1439 = vsub.s32 0, %v1438
    %v1440 = vrot.slane %v1409, %v1439
    %v1441 = vmul.f32 %v1435, %v1440
    %v1442 = vmul.f32 %v1436, %v1440
    %v1443 = vlaneseq
    %v1444 = vshrl.u32 %v1443, 7
    %v1445 = vsub.s32 0, %v1444
    %v1446 = vrot.slane %v1410, %v1445
    %v1447 = vadd.f32 %v1441, %v1446
    %v1448 = vadd.f32 %v1442, %v1446
    %v1449 = vld [vmem:[%s2 + $0xb0] sm:$0xf]
    %v1450 = vld [vmem:[%s2 + $0xb4] sm:$0xf]
    %v1451 = vld [vmem:[%s2 + $0xb8] sm:$0xf]
    %v1452 = vld [vmem:[%s2 + $0xbc] sm:$0xf]
    %v1453 = vpack.c.bf16 %v1448, %v1447
    %v1454 = vld [vmem:[%s1 + $0x15] sm:$0x1]
    %v1455 = vlaneseq
    %v1456 = vshrl.u32 %v1455, 7
    %v1457 = vsub.s32 0, %v1456
    %v1458 = vrot.slane %v1454, %v1457
    %v1463 = vunpack.c.l.b16 %v1449
    %v1464 = vunpack.c.l.b16 %v1450
    %v1465 = vunpack.c.l.b16 %v1451
    %v1466 = vunpack.c.l.b16 %v1452
    %v1467 = vpack.c.b16 %v1464, %v1463
    %v1468 = vpack.c.b16 %v1466, %v1465
    %v1472 = vsel %vm38, %v1453, 0
    %1474 = vmatprep.subr.bf16.mxu0 0
    %1475 = vmatpush1.bf16.msra.mxu0 0
    %1476 = vmatprep.subr.bf16.mxu0 0
    %1477 = vmatpush1.bf16.msra.mxu0 0
    %1478 = vmatprep.subr.bf16.mxu0 0
    %1479 = vmatpush1.bf16.msra.mxu0 0
    %1480 = vmatprep.subr.bf16.mxu0 0
    %1481 = vmatpush1.bf16.msra.mxu0 0
    %1482 = vmatprep.subr.bf16.mxu0 0
    %1483 = vmatpush1.bf16.msra.mxu0 0
    %1484 = vmatprep.subr.bf16.mxu0 0
    %1485 = vmatpush1.bf16.msra.mxu0 0
    %1486 = vmatprep.subr.bf16.mxu0 0
    %1487 = vmatpush1.bf16.msra.mxu0 %v1468
    %1488 = vmatprep.subr.bf16.mxu0 0
    %1489 = vmatpush1.bf16.msra.mxu0 %v1467
    %1490 = vmatprep.subr.bf16.mxu0 0
    %1491 = vmatpush2.bf16.msra.mxu0 0
    %1492 = vmatprep.subr.bf16.mxu0 0
    %1493 = vmatpush2.bf16.msra.mxu0 0
    %1494 = vmatprep.subr.bf16.mxu0 0
    %1495 = vmatpush2.bf16.msra.mxu0 0
    %1496 = vmatprep.subr.bf16.mxu0 0
    %1497 = vmatpush2.bf16.msra.mxu0 0
    %1498 = vmatprep.subr.bf16.mxu0 0
    %1499 = vmatpush2.bf16.msra.mxu0 0
    %1500 = vmatprep.subr.bf16.mxu0 0
    %1501 = vmatpush2.bf16.msra.mxu0 0
    %1502 = vmatprep.subr.bf16.mxu0 0
    %1503 = vmatpush2.bf16.msra.mxu0 0
    %1504 = vmatprep.subr.bf16.mxu0 0
    %1505 = vmatpush2.bf16.msra.mxu0 0
    %1506 = vmatprep.mubr.bf16.mxu0 0
    %1507 = vmatmul.mubr.bf16.gmra.mxu0 %v1472
    %v1508 = vpop.f32.mrf.mxu0
    %v1509 = vadd.f32 %v1458, %v1508
    %v1510 = vpop.f32.mrf.mxu0
    %v1511 = vpop.f32.mrf.mxu0
    %v1512 = vadd.f32 %v1458, %v1511
    %v1513 = vpop.f32.mrf.mxu0
    %1514 = vdwg.mxu0
    %1515 = vst [vmem:[#allocation2] sm:$0xff] %v1509
    %1516 = vst [vmem:[#allocation2 + $0x8] sm:$0xff] %v1512
    %v1517 = vld [vmem:[%s3] sm:$0xff]
    %v1518 = vld [vmem:[%s3 + $0x8] sm:$0xff]
    %1519 = vmax.xlane.f32.xlu0 %v1509
    %v1520 = vpop.xlane.xlu0 %1519
    %1521 = vmax.xlane.f32.xlu0 %v1512
    %v1522 = vpop.xlane.xlu0 %1521
    %v1523 = vsub.f32 %v1509, %v1520
    %v1524 = vsub.f32 %v1512, %v1522
    %v1525 = vmul.f32 %v1523, 1.442695
    %v1526 = vpow.pop %v1525
    %v1527 = vmul.f32 %v1524, 1.442695
    %v1528 = vpow.pop %v1527
    %1529 = vadd.xlane.f32.xlu0 %v1526
    %v1530 = vpop.xlane.xlu0 %1529
    %1531 = vadd.xlane.f32.xlu0 %v1528
    %v1532 = vpop.xlane.xlu0 %1531
    %v1533 = vlog2.pop %v1530
    %v1534 = vmul.f32 %v1533, 0.6931472
    %v1535 = vlog2.pop %v1532
    %v1536 = vmul.f32 %v1535, 0.6931472
    %v1537 = vadd.f32 %v1534, %v1520
    %v1538 = vadd.f32 %v1536, %v1522
    %v1539 = vmul.f32 %v1517, %v1509
    %v1540 = vmul.f32 %v1518, %v1512
    %1541 = vadd.xlane.f32.xlu0 %v1539
    %v1542 = vpop.xlane.xlu0 %1541
    %1543 = vadd.xlane.f32.xlu0 %v1540
    %v1544 = vpop.xlane.xlu0 %1543
    %1545 = vadd.xlane.f32.xlu0 %v1517
    %v1546 = vpop.xlane.xlu0 %1545
    %1547 = vadd.xlane.f32.xlu0 %v1518
    %v1548 = vpop.xlane.xlu0 %1547
    %v1549 = vsub.f32 %v1537, %v1542
    %v1550 = vsub.f32 %v1538, %v1544
    %v1551 = vmul.f32 %v1549, %v1546
    %v1552 = vmul.f32 %v1550, %v1548
    %vm1553 = vcmask 7168
    %v1554 = vsel %vm1553, %v1551, 0.0
    %v1555 = vsel %vm1553, %v1552, 0.0
    %v1556 = vadd.f32 %v1554, %v1555
    %1557 = vadd.xlane.f32.xlu0 %v1556
    %v1558 = vpop.xlane.xlu0 %1557
    %v1559 = vrot.slane %v1558, 4
    %v1560 = vadd.f32 %v1558, %v1559
    %v1561 = vrot.slane %v1560, 2
    %v1562 = vadd.f32 %v1560, %v1561
    %v1563 = vrot.slane %v1562, 1
    %v1564 = vadd.f32 %v1562, %v1563
    %s1565 = vtos %v1564
    %v1566 = vsel %vm1553, %v1546, 0.0
    %v1567 = vsel %vm1553, %v1548, 0.0
    %v1568 = vadd.f32 %v1566, %v1567
    %1569 = vadd.xlane.f32.xlu0 %v1568
    %v1570 = vpop.xlane.xlu0 %1569
    %v1571 = vrot.slane %v1570, 4
    %v1572 = vadd.f32 %v1570, %v1571
    %v1573 = vrot.slane %v1572, 2
    %v1574 = vadd.f32 %v1572, %v1573
    %v1575 = vrot.slane %v1574, 1
    %v1576 = vadd.f32 %v1574, %v1575
    %s1577 = vtos %v1576
    %v1578 = vstv %s1577
    %v1579 = vrcp.pop %v1578
    %s1580 = vtos %v1579
    %s1581 = smul.f32 %s1565, %s1580
    %v1582 = vstv %s1581
    %vm1583 = vcmask 0
    %1584 = vst.msk [vmem:[#allocation4] sm:$0x1] %vm1583, %v1582
    // Predicated region
    $region18: #{bert_pred_forward.1} parent=1 // pred_check
      _
    $region19: #{bert_pred_forward.1} parent=1 // pred_check_branch
      %1586 = sbr.rel (0) target = $region21
    $region20: #{bert_pred_forward.1} parent=1 // pred_region
      %s1588 = ssub.s32 256, 256
      %1589 = vsyncadd [#allocation3], %s1588
      %s1590 = sshll.u32 [#allocation2], 4
      %s1591 = int_to_ptr.vmem [resolvable:$true] %s1590
      %1596 = dma.vmem_to_hbm [thread:$0]  %s1591, 256, %s4, [#allocation3], 128, 128, 8
    $region21: #{bert_pred_forward.1} parent=1 // pred_fallthru
      _
    // Predicated region
    $region22: #{bert_pred_forward.1} parent=1 // pred_check
      _
    $region23: #{bert_pred_forward.1} parent=1 // pred_check_branch
      %1598 = sbr.rel (0) target = $region25
    $region24: #{bert_pred_forward.1} parent=1 // pred_region
      %s1600 = ssub.s32 16, 16
      %1601 = vsyncadd [#allocation5], %s1600
      %s1603 = sshll.u32 [#allocation4], 4
      %s1604 = int_to_ptr.vmem [resolvable:$true] %s1603
      %1606 = dma.vmem_to_hbm [thread:$0]  %s1604, 16, %s5, [#allocation5]
    $region25: #{bert_pred_forward.1} parent=1 // pred_fallthru
      _
    // Predicated region
    $region26: #{bert_pred_forward.1} parent=1 // pred_check
      _
    $region27: #{bert_pred_forward.1} parent=1 // pred_check_branch
      %1608 = sbr.rel (0) target = $region29
    $region28: #{bert_pred_forward.1} parent=1 // pred_region
      %1609 = dma.done [#allocation3], 256
    $region29: #{bert_pred_forward.1} parent=1 // pred_fallthru
      _
    // Predicated region
    $region30: #{bert_pred_forward.1} parent=1 // pred_check
      _
    $region31: #{bert_pred_forward.1} parent=1 // pred_check_branch
      %1611 = sbr.rel (0) target = $region33
    $region32: #{bert_pred_forward.1} parent=1 // pred_region
      %1612 = dma.done [#allocation5], 16
    $region33: #{bert_pred_forward.1} parent=1 // pred_fallthru
      _
    %1613 = vsyncpa [#allocation3], 1
    %1614 = vsyncpa [#allocation5], 1

</llo_original>
